<compile_context>
chip_gen: v6e
topology: v6e:2x2x1
jax: 0.10.0
libtpu: 0.0.40
codegen_flags: <defaults>
</compile_context>

<pallas_src>
import jax
import jax.numpy as jnp
from jax.experimental import pallas as pl
from jax.experimental.pallas import tpu as pltpu

_N_ACC = 8  # independent accumulators to break the serial VPU add chain


def _rotate_lanes(x, shift):
    """out[..., k] = x[..., (k - shift) % d]   (jnp.roll semantics, static shift)."""
    d = x.shape[-1]
    shift = shift % d
    if shift == 0:
        return x
    return jnp.concatenate([x[..., d - shift:], x[..., :d - shift]], axis=-1)


def hrr_classifier_kernel(prob_ref, lem_ref,
                          w_enc_ref, b_enc_ref,
                          w_cls_ref, b_cls_ref,
                          out_ref):
    tb = prob_ref.shape[0]

    # --- hrrmodel: shared linear encoder + tanh, fused for both inputs ------
    x = jnp.concatenate([prob_ref[...], lem_ref[...]], axis=0)          # (2*TB, D_in)
    h = jnp.tanh(jnp.dot(x, w_enc_ref[...],
                         preferred_element_type=jnp.float32) + b_enc_ref[...])
    p_hrr = h[:tb]                                                      # (TB, D_hrr)
    l_hrr = h[tb:]                                                      # (TB, D_hrr)
    d = p_hrr.shape[-1]

    # --- featurizer: circular convolution (HRR binding) ---------------------
    #   feat[b, k] = sum_j p_hrr[b, j] * l_hrr[b, (k - j) mod D]
    # Hoist all per-column lane broadcasts out of the loop: one XLU transpose
    # + one broadcast, then static leading-index slices inside the loop.
    p_bcast = jnp.broadcast_to(jnp.transpose(p_hrr)[:, :, None], (d, tb, d))

    # Independent partial accumulators so the VALU slots retire FMAs in
    # parallel instead of a single 64-deep dependency chain.
    accs = [jnp.zeros((tb, d), jnp.float32) for _ in range(_N_ACC)]
    for j in range(d):  # static unroll; D_hrr is small
        accs[j % _N_ACC] = accs[j % _N_ACC] + p_bcast[j] * _rotate_lanes(l_hrr, j)
    while len(accs) > 1:  # shallow pairwise tree-sum
        accs = [accs[i] + accs[i + 1] for i in range(0, len(accs), 2)]
    feat = accs[0]

    # --- classifier: linear head ---------------------------------------------
    logits = jnp.dot(feat, w_cls_ref[...],
                     preferred_element_type=jnp.float32) + b_cls_ref[...]
    out_ref[...] = logits.astype(out_ref.dtype)


def _round_up(x, m):
    return (x + m - 1) // m * m


def hrr_classifier(problem, lemma, w_enc, b_enc, w_cls, b_cls, *, block_b=128):
    batch, d_in = problem.shape
    d_hrr = w_enc.shape[1]
    n_cls = w_cls.shape[1]

    # Batch tile: multiple of 8 (sublane granularity), capped at block_b.
    tb = min(block_b, _round_up(batch, 8))
    padded = _round_up(batch, tb)
    if padded != batch:
        pad = padded - batch
        problem = jnp.pad(problem, ((0, pad), (0, 0)))
        lemma = jnp.pad(lemma, ((0, pad), (0, 0)))

    out = pl.pallas_call(
        hrr_classifier_kernel,
        out_shape=jax.ShapeDtypeStruct((padded, n_cls), jnp.float32),
        grid=(padded // tb,),
        in_specs=[
            # batch-tiled activations (pipelined across grid steps)
            pl.BlockSpec((tb, d_in), lambda i: (i, 0)),
            pl.BlockSpec((tb, d_in), lambda i: (i, 0)),
            # weights / biases: constant index_map -> VMEM-resident
            pl.BlockSpec((d_in, d_hrr), lambda i: (0, 0)),
            pl.BlockSpec((1, d_hrr), lambda i: (0, 0)),
            pl.BlockSpec((d_hrr, n_cls), lambda i: (0, 0)),
            pl.BlockSpec((1, n_cls), lambda i: (0, 0)),
        ],
        out_specs=pl.BlockSpec((tb, n_cls), lambda i: (i, 0)),
        compiler_params=pltpu.CompilerParams(
            dimension_semantics=("parallel",)),
    )(problem, lemma, w_enc, b_enc, w_cls, b_cls)
    return out[:batch] if padded != batch else out


def hrr_classifier_ref(problem, lemma, w_enc, b_enc, w_cls, b_cls):
    """Pure-JAX reference (independent circulant-gather formulation)."""
    p = jnp.tanh(problem @ w_enc + b_enc)
    l = jnp.tanh(lemma @ w_enc + b_enc)
    d = p.shape[-1]
    idx = (jnp.arange(d)[None, :] - jnp.arange(d)[:, None]) % d   # idx[j, k] = (k - j) % d
    circ = l[:, idx]                                              # circ[b, j, k] = l[b, (k-j)%d]
    feat = jnp.einsum('bj,bjk->bk', p, circ)
    return feat @ w_cls + b_cls


if __name__ == "__main__":
    B, D_IN, D_HRR, C = 8, 32, 64, 8

    key = jax.random.PRNGKey(0)
    k_prob, k_lem, k_we, k_be, k_wc, k_bc = jax.random.split(key, 6)

    problem = jax.random.normal(k_prob, (B, D_IN), dtype=jnp.float32)
    lemma = jax.random.normal(k_lem, (B, D_IN), dtype=jnp.float32)

    # Deterministic synthetic parameters (PyTorch-Linear-like scale).
    w_enc = jax.random.normal(k_we, (D_IN, D_HRR), dtype=jnp.float32) / jnp.sqrt(D_IN)
    b_enc = jax.random.normal(k_be, (1, D_HRR), dtype=jnp.float32) * 0.01
    w_cls = jax.random.normal(k_wc, (D_HRR, C), dtype=jnp.float32) / jnp.sqrt(D_HRR)
    b_cls = jax.random.normal(k_bc, (1, C), dtype=jnp.float32) * 0.01

    out = hrr_classifier(problem, lemma, w_enc, b_enc, w_cls, b_cls)
    jax.block_until_ready(out)

    ref = hrr_classifier_ref(problem, lemma, w_enc, b_enc, w_cls, b_cls)
    assert out.shape == (B, C)
    assert jnp.allclose(out, ref, atol=1e-4, rtol=1e-4), (out, ref)

    print("KERNEL_OK")
</pallas_src>

<mosaic_0001>
module attributes {stable_mosaic.version = 11 : i64} {
  func.func @hrr_classifier_kernel(%arg0: i32, %arg1: memref<8x32xf32, #tpu.memory_space<vmem>>, %arg2: memref<8x32xf32, #tpu.memory_space<vmem>>, %arg3: memref<32x64xf32, #tpu.memory_space<vmem>>, %arg4: memref<1x64xf32, #tpu.memory_space<vmem>>, %arg5: memref<64x8xf32, #tpu.memory_space<vmem>>, %arg6: memref<1x8xf32, #tpu.memory_space<vmem>>, %arg7: memref<8x8xf32, #tpu.memory_space<vmem>>) attributes {dimension_semantics = [#tpu.dimension_semantics<parallel>], iteration_bounds = array<i64: 1>, scalar_prefetch = 0 : i64, scratch_operands = 0 : i64, tpu.core_type = #tpu.core_type<tc>, window_params = [{transform_indices = @transform_0, window_bounds = array<i64: 8, 32>}, {transform_indices = @transform_1, window_bounds = array<i64: 8, 32>}, {pipeline_mode = #tpu.pipeline_mode<synchronous>, transform_indices = @transform_2, window_bounds = array<i64: 32, 64>}, {pipeline_mode = #tpu.pipeline_mode<synchronous>, transform_indices = @transform_3, window_bounds = array<i64: 1, 64>}, {pipeline_mode = #tpu.pipeline_mode<synchronous>, transform_indices = @transform_4, window_bounds = array<i64: 64, 8>}, {pipeline_mode = #tpu.pipeline_mode<synchronous>, transform_indices = @transform_5, window_bounds = array<i64: 1, 8>}, {transform_indices = @transform_6, window_bounds = array<i64: 8, 8>}]} {
    %c0 = arith.constant 0 : index
    %c0_0 = arith.constant 0 : index
    %0 = vector.load %arg1[%c0, %c0_0] : memref<8x32xf32, #tpu.memory_space<vmem>>, vector<8x32xf32>
    %c0_1 = arith.constant 0 : index
    %c0_2 = arith.constant 0 : index
    %1 = vector.load %arg2[%c0_1, %c0_2] : memref<8x32xf32, #tpu.memory_space<vmem>>, vector<8x32xf32>
    %2 = tpu.concatenate %0, %1 in 0 : vector<8x32xf32>, vector<8x32xf32> -> vector<16x32xf32>
    %c0_3 = arith.constant 0 : index
    %c0_4 = arith.constant 0 : index
    %3 = vector.load %arg3[%c0_3, %c0_4] : memref<32x64xf32, #tpu.memory_space<vmem>>, vector<32x64xf32>
    %cst = arith.constant dense<0.000000e+00> : vector<16x64xf32>
    %4 = tpu.matmul %2, %3, %cst {dimension_numbers = #tpu.dot_dimension_numbers<[1], [0], [0], [1], [0, 0, 1, 1], [], []>} : vector<16x32xf32>, vector<32x64xf32>, vector<16x64xf32> -> vector<16x64xf32>
    %c0_5 = arith.constant 0 : index
    %c0_6 = arith.constant 0 : index
    %5 = vector.load %arg4[%c0_5, %c0_6] : memref<1x64xf32, #tpu.memory_space<vmem>>, vector<1x64xf32>
    %6 = vector.broadcast %5 : vector<1x64xf32> to vector<16x64xf32>
    %7 = arith.addf %4, %6 : vector<16x64xf32>
    %8 = math.tanh %7 : vector<16x64xf32>
    %9 = vector.extract_strided_slice %8 {offsets = [0, 0], sizes = [8, 64], strides = [1, 1]} : vector<16x64xf32> to vector<8x64xf32>
    %10 = vector.extract_strided_slice %8 {offsets = [8, 0], sizes = [8, 64], strides = [1, 1]} : vector<16x64xf32> to vector<8x64xf32>
    %11 = tpu.transpose %9, [1, 0] : vector<8x64xf32> -> vector<64x8xf32>
    %12 = vector.shape_cast %11 : vector<64x8xf32> to vector<64x8x1xf32>
    %13 = vector.shape_cast %12 : vector<64x8x1xf32> to vector<64x8x1xf32>
    %14 = vector.broadcast %13 : vector<64x8x1xf32> to vector<64x8x64xf32>
    %cst_7 = arith.constant 0.000000e+00 : f32
    %15 = vector.broadcast %cst_7 : f32 to vector<8x64xf32>
    %cst_8 = arith.constant 0.000000e+00 : f32
    %16 = vector.broadcast %cst_8 : f32 to vector<8x64xf32>
    %cst_9 = arith.constant 0.000000e+00 : f32
    %17 = vector.broadcast %cst_9 : f32 to vector<8x64xf32>
    %cst_10 = arith.constant 0.000000e+00 : f32
    %18 = vector.broadcast %cst_10 : f32 to vector<8x64xf32>
    %cst_11 = arith.constant 0.000000e+00 : f32
    %19 = vector.broadcast %cst_11 : f32 to vector<8x64xf32>
    %cst_12 = arith.constant 0.000000e+00 : f32
    %20 = vector.broadcast %cst_12 : f32 to vector<8x64xf32>
    %cst_13 = arith.constant 0.000000e+00 : f32
    %21 = vector.broadcast %cst_13 : f32 to vector<8x64xf32>
    %cst_14 = arith.constant 0.000000e+00 : f32
    %22 = vector.broadcast %cst_14 : f32 to vector<8x64xf32>
    %23 = vector.extract_strided_slice %14 {offsets = [0, 0, 0], sizes = [1, 8, 64], strides = [1, 1, 1]} : vector<64x8x64xf32> to vector<1x8x64xf32>
    %24 = vector.shape_cast %23 : vector<1x8x64xf32> to vector<8x64xf32>
    %25 = arith.mulf %24, %10 : vector<8x64xf32>
    %26 = arith.addf %15, %25 : vector<8x64xf32>
    %27 = vector.extract_strided_slice %14 {offsets = [1, 0, 0], sizes = [1, 8, 64], strides = [1, 1, 1]} : vector<64x8x64xf32> to vector<1x8x64xf32>
    %28 = vector.shape_cast %27 : vector<1x8x64xf32> to vector<8x64xf32>
    %29 = vector.extract_strided_slice %10 {offsets = [0, 63], sizes = [8, 1], strides = [1, 1]} : vector<8x64xf32> to vector<8x1xf32>
    %30 = vector.extract_strided_slice %10 {offsets = [0, 0], sizes = [8, 63], strides = [1, 1]} : vector<8x64xf32> to vector<8x63xf32>
    %31 = tpu.concatenate %29, %30 in 1 : vector<8x1xf32>, vector<8x63xf32> -> vector<8x64xf32>
    %32 = arith.mulf %28, %31 : vector<8x64xf32>
    %33 = arith.addf %16, %32 : vector<8x64xf32>
    %34 = vector.extract_strided_slice %14 {offsets = [2, 0, 0], sizes = [1, 8, 64], strides = [1, 1, 1]} : vector<64x8x64xf32> to vector<1x8x64xf32>
    %35 = vector.shape_cast %34 : vector<1x8x64xf32> to vector<8x64xf32>
    %36 = vector.extract_strided_slice %10 {offsets = [0, 62], sizes = [8, 2], strides = [1, 1]} : vector<8x64xf32> to vector<8x2xf32>
    %37 = vector.extract_strided_slice %10 {offsets = [0, 0], sizes = [8, 62], strides = [1, 1]} : vector<8x64xf32> to vector<8x62xf32>
    %38 = tpu.concatenate %36, %37 in 1 : vector<8x2xf32>, vector<8x62xf32> -> vector<8x64xf32>
    %39 = arith.mulf %35, %38 : vector<8x64xf32>
    %40 = arith.addf %17, %39 : vector<8x64xf32>
    %41 = vector.extract_strided_slice %14 {offsets = [3, 0, 0], sizes = [1, 8, 64], strides = [1, 1, 1]} : vector<64x8x64xf32> to vector<1x8x64xf32>
    %42 = vector.shape_cast %41 : vector<1x8x64xf32> to vector<8x64xf32>
    %43 = vector.extract_strided_slice %10 {offsets = [0, 61], sizes = [8, 3], strides = [1, 1]} : vector<8x64xf32> to vector<8x3xf32>
    %44 = vector.extract_strided_slice %10 {offsets = [0, 0], sizes = [8, 61], strides = [1, 1]} : vector<8x64xf32> to vector<8x61xf32>
    %45 = tpu.concatenate %43, %44 in 1 : vector<8x3xf32>, vector<8x61xf32> -> vector<8x64xf32>
    %46 = arith.mulf %42, %45 : vector<8x64xf32>
    %47 = arith.addf %18, %46 : vector<8x64xf32>
    %48 = vector.extract_strided_slice %14 {offsets = [4, 0, 0], sizes = [1, 8, 64], strides = [1, 1, 1]} : vector<64x8x64xf32> to vector<1x8x64xf32>
    %49 = vector.shape_cast %48 : vector<1x8x64xf32> to vector<8x64xf32>
    %50 = vector.extract_strided_slice %10 {offsets = [0, 60], sizes = [8, 4], strides = [1, 1]} : vector<8x64xf32> to vector<8x4xf32>
    %51 = vector.extract_strided_slice %10 {offsets = [0, 0], sizes = [8, 60], strides = [1, 1]} : vector<8x64xf32> to vector<8x60xf32>
    %52 = tpu.concatenate %50, %51 in 1 : vector<8x4xf32>, vector<8x60xf32> -> vector<8x64xf32>
    %53 = arith.mulf %49, %52 : vector<8x64xf32>
    %54 = arith.addf %19, %53 : vector<8x64xf32>
    %55 = vector.extract_strided_slice %14 {offsets = [5, 0, 0], sizes = [1, 8, 64], strides = [1, 1, 1]} : vector<64x8x64xf32> to vector<1x8x64xf32>
    %56 = vector.shape_cast %55 : vector<1x8x64xf32> to vector<8x64xf32>
    %57 = vector.extract_strided_slice %10 {offsets = [0, 59], sizes = [8, 5], strides = [1, 1]} : vector<8x64xf32> to vector<8x5xf32>
    %58 = vector.extract_strided_slice %10 {offsets = [0, 0], sizes = [8, 59], strides = [1, 1]} : vector<8x64xf32> to vector<8x59xf32>
    %59 = tpu.concatenate %57, %58 in 1 : vector<8x5xf32>, vector<8x59xf32> -> vector<8x64xf32>
    %60 = arith.mulf %56, %59 : vector<8x64xf32>
    %61 = arith.addf %20, %60 : vector<8x64xf32>
    %62 = vector.extract_strided_slice %14 {offsets = [6, 0, 0], sizes = [1, 8, 64], strides = [1, 1, 1]} : vector<64x8x64xf32> to vector<1x8x64xf32>
    %63 = vector.shape_cast %62 : vector<1x8x64xf32> to vector<8x64xf32>
    %64 = vector.extract_strided_slice %10 {offsets = [0, 58], sizes = [8, 6], strides = [1, 1]} : vector<8x64xf32> to vector<8x6xf32>
    %65 = vector.extract_strided_slice %10 {offsets = [0, 0], sizes = [8, 58], strides = [1, 1]} : vector<8x64xf32> to vector<8x58xf32>
    %66 = tpu.concatenate %64, %65 in 1 : vector<8x6xf32>, vector<8x58xf32> -> vector<8x64xf32>
    %67 = arith.mulf %63, %66 : vector<8x64xf32>
    %68 = arith.addf %21, %67 : vector<8x64xf32>
    %69 = vector.extract_strided_slice %14 {offsets = [7, 0, 0], sizes = [1, 8, 64], strides = [1, 1, 1]} : vector<64x8x64xf32> to vector<1x8x64xf32>
    %70 = vector.shape_cast %69 : vector<1x8x64xf32> to vector<8x64xf32>
    %71 = vector.extract_strided_slice %10 {offsets = [0, 57], sizes = [8, 7], strides = [1, 1]} : vector<8x64xf32> to vector<8x7xf32>
    %72 = vector.extract_strided_slice %10 {offsets = [0, 0], sizes = [8, 57], strides = [1, 1]} : vector<8x64xf32> to vector<8x57xf32>
    %73 = tpu.concatenate %71, %72 in 1 : vector<8x7xf32>, vector<8x57xf32> -> vector<8x64xf32>
    %74 = arith.mulf %70, %73 : vector<8x64xf32>
    %75 = arith.addf %22, %74 : vector<8x64xf32>
    %76 = vector.extract_strided_slice %14 {offsets = [8, 0, 0], sizes = [1, 8, 64], strides = [1, 1, 1]} : vector<64x8x64xf32> to vector<1x8x64xf32>
    %77 = vector.shape_cast %76 : vector<1x8x64xf32> to vector<8x64xf32>
    %78 = vector.extract_strided_slice %10 {offsets = [0, 56], sizes = [8, 8], strides = [1, 1]} : vector<8x64xf32> to vector<8x8xf32>
    %79 = vector.extract_strided_slice %10 {offsets = [0, 0], sizes = [8, 56], strides = [1, 1]} : vector<8x64xf32> to vector<8x56xf32>
    %80 = tpu.concatenate %78, %79 in 1 : vector<8x8xf32>, vector<8x56xf32> -> vector<8x64xf32>
    %81 = arith.mulf %77, %80 : vector<8x64xf32>
    %82 = arith.addf %26, %81 : vector<8x64xf32>
    %83 = vector.extract_strided_slice %14 {offsets = [9, 0, 0], sizes = [1, 8, 64], strides = [1, 1, 1]} : vector<64x8x64xf32> to vector<1x8x64xf32>
    %84 = vector.shape_cast %83 : vector<1x8x64xf32> to vector<8x64xf32>
    %85 = vector.extract_strided_slice %10 {offsets = [0, 55], sizes = [8, 9], strides = [1, 1]} : vector<8x64xf32> to vector<8x9xf32>
    %86 = vector.extract_strided_slice %10 {offsets = [0, 0], sizes = [8, 55], strides = [1, 1]} : vector<8x64xf32> to vector<8x55xf32>
    %87 = tpu.concatenate %85, %86 in 1 : vector<8x9xf32>, vector<8x55xf32> -> vector<8x64xf32>
    %88 = arith.mulf %84, %87 : vector<8x64xf32>
    %89 = arith.addf %33, %88 : vector<8x64xf32>
    %90 = vector.extract_strided_slice %14 {offsets = [10, 0, 0], sizes = [1, 8, 64], strides = [1, 1, 1]} : vector<64x8x64xf32> to vector<1x8x64xf32>
    %91 = vector.shape_cast %90 : vector<1x8x64xf32> to vector<8x64xf32>
    %92 = vector.extract_strided_slice %10 {offsets = [0, 54], sizes = [8, 10], strides = [1, 1]} : vector<8x64xf32> to vector<8x10xf32>
    %93 = vector.extract_strided_slice %10 {offsets = [0, 0], sizes = [8, 54], strides = [1, 1]} : vector<8x64xf32> to vector<8x54xf32>
    %94 = tpu.concatenate %92, %93 in 1 : vector<8x10xf32>, vector<8x54xf32> -> vector<8x64xf32>
    %95 = arith.mulf %91, %94 : vector<8x64xf32>
    %96 = arith.addf %40, %95 : vector<8x64xf32>
    %97 = vector.extract_strided_slice %14 {offsets = [11, 0, 0], sizes = [1, 8, 64], strides = [1, 1, 1]} : vector<64x8x64xf32> to vector<1x8x64xf32>
    %98 = vector.shape_cast %97 : vector<1x8x64xf32> to vector<8x64xf32>
    %99 = vector.extract_strided_slice %10 {offsets = [0, 53], sizes = [8, 11], strides = [1, 1]} : vector<8x64xf32> to vector<8x11xf32>
    %100 = vector.extract_strided_slice %10 {offsets = [0, 0], sizes = [8, 53], strides = [1, 1]} : vector<8x64xf32> to vector<8x53xf32>
    %101 = tpu.concatenate %99, %100 in 1 : vector<8x11xf32>, vector<8x53xf32> -> vector<8x64xf32>
    %102 = arith.mulf %98, %101 : vector<8x64xf32>
    %103 = arith.addf %47, %102 : vector<8x64xf32>
    %104 = vector.extract_strided_slice %14 {offsets = [12, 0, 0], sizes = [1, 8, 64], strides = [1, 1, 1]} : vector<64x8x64xf32> to vector<1x8x64xf32>
    %105 = vector.shape_cast %104 : vector<1x8x64xf32> to vector<8x64xf32>
    %106 = vector.extract_strided_slice %10 {offsets = [0, 52], sizes = [8, 12], strides = [1, 1]} : vector<8x64xf32> to vector<8x12xf32>
    %107 = vector.extract_strided_slice %10 {offsets = [0, 0], sizes = [8, 52], strides = [1, 1]} : vector<8x64xf32> to vector<8x52xf32>
    %108 = tpu.concatenate %106, %107 in 1 : vector<8x12xf32>, vector<8x52xf32> -> vector<8x64xf32>
    %109 = arith.mulf %105, %108 : vector<8x64xf32>
    %110 = arith.addf %54, %109 : vector<8x64xf32>
    %111 = vector.extract_strided_slice %14 {offsets = [13, 0, 0], sizes = [1, 8, 64], strides = [1, 1, 1]} : vector<64x8x64xf32> to vector<1x8x64xf32>
    %112 = vector.shape_cast %111 : vector<1x8x64xf32> to vector<8x64xf32>
    %113 = vector.extract_strided_slice %10 {offsets = [0, 51], sizes = [8, 13], strides = [1, 1]} : vector<8x64xf32> to vector<8x13xf32>
    %114 = vector.extract_strided_slice %10 {offsets = [0, 0], sizes = [8, 51], strides = [1, 1]} : vector<8x64xf32> to vector<8x51xf32>
    %115 = tpu.concatenate %113, %114 in 1 : vector<8x13xf32>, vector<8x51xf32> -> vector<8x64xf32>
    %116 = arith.mulf %112, %115 : vector<8x64xf32>
    %117 = arith.addf %61, %116 : vector<8x64xf32>
    %118 = vector.extract_strided_slice %14 {offsets = [14, 0, 0], sizes = [1, 8, 64], strides = [1, 1, 1]} : vector<64x8x64xf32> to vector<1x8x64xf32>
    %119 = vector.shape_cast %118 : vector<1x8x64xf32> to vector<8x64xf32>
    %120 = vector.extract_strided_slice %10 {offsets = [0, 50], sizes = [8, 14], strides = [1, 1]} : vector<8x64xf32> to vector<8x14xf32>
    %121 = vector.extract_strided_slice %10 {offsets = [0, 0], sizes = [8, 50], strides = [1, 1]} : vector<8x64xf32> to vector<8x50xf32>
    %122 = tpu.concatenate %120, %121 in 1 : vector<8x14xf32>, vector<8x50xf32> -> vector<8x64xf32>
    %123 = arith.mulf %119, %122 : vector<8x64xf32>
    %124 = arith.addf %68, %123 : vector<8x64xf32>
    %125 = vector.extract_strided_slice %14 {offsets = [15, 0, 0], sizes = [1, 8, 64], strides = [1, 1, 1]} : vector<64x8x64xf32> to vector<1x8x64xf32>
    %126 = vector.shape_cast %125 : vector<1x8x64xf32> to vector<8x64xf32>
    %127 = vector.extract_strided_slice %10 {offsets = [0, 49], sizes = [8, 15], strides = [1, 1]} : vector<8x64xf32> to vector<8x15xf32>
    %128 = vector.extract_strided_slice %10 {offsets = [0, 0], sizes = [8, 49], strides = [1, 1]} : vector<8x64xf32> to vector<8x49xf32>
    %129 = tpu.concatenate %127, %128 in 1 : vector<8x15xf32>, vector<8x49xf32> -> vector<8x64xf32>
    %130 = arith.mulf %126, %129 : vector<8x64xf32>
    %131 = arith.addf %75, %130 : vector<8x64xf32>
    %132 = vector.extract_strided_slice %14 {offsets = [16, 0, 0], sizes = [1, 8, 64], strides = [1, 1, 1]} : vector<64x8x64xf32> to vector<1x8x64xf32>
    %133 = vector.shape_cast %132 : vector<1x8x64xf32> to vector<8x64xf32>
    %134 = vector.extract_strided_slice %10 {offsets = [0, 48], sizes = [8, 16], strides = [1, 1]} : vector<8x64xf32> to vector<8x16xf32>
    %135 = vector.extract_strided_slice %10 {offsets = [0, 0], sizes = [8, 48], strides = [1, 1]} : vector<8x64xf32> to vector<8x48xf32>
    %136 = tpu.concatenate %134, %135 in 1 : vector<8x16xf32>, vector<8x48xf32> -> vector<8x64xf32>
    %137 = arith.mulf %133, %136 : vector<8x64xf32>
    %138 = arith.addf %82, %137 : vector<8x64xf32>
    %139 = vector.extract_strided_slice %14 {offsets = [17, 0, 0], sizes = [1, 8, 64], strides = [1, 1, 1]} : vector<64x8x64xf32> to vector<1x8x64xf32>
    %140 = vector.shape_cast %139 : vector<1x8x64xf32> to vector<8x64xf32>
    %141 = vector.extract_strided_slice %10 {offsets = [0, 47], sizes = [8, 17], strides = [1, 1]} : vector<8x64xf32> to vector<8x17xf32>
    %142 = vector.extract_strided_slice %10 {offsets = [0, 0], sizes = [8, 47], strides = [1, 1]} : vector<8x64xf32> to vector<8x47xf32>
    %143 = tpu.concatenate %141, %142 in 1 : vector<8x17xf32>, vector<8x47xf32> -> vector<8x64xf32>
    %144 = arith.mulf %140, %143 : vector<8x64xf32>
    %145 = arith.addf %89, %144 : vector<8x64xf32>
    %146 = vector.extract_strided_slice %14 {offsets = [18, 0, 0], sizes = [1, 8, 64], strides = [1, 1, 1]} : vector<64x8x64xf32> to vector<1x8x64xf32>
    %147 = vector.shape_cast %146 : vector<1x8x64xf32> to vector<8x64xf32>
    %148 = vector.extract_strided_slice %10 {offsets = [0, 46], sizes = [8, 18], strides = [1, 1]} : vector<8x64xf32> to vector<8x18xf32>
    %149 = vector.extract_strided_slice %10 {offsets = [0, 0], sizes = [8, 46], strides = [1, 1]} : vector<8x64xf32> to vector<8x46xf32>
    %150 = tpu.concatenate %148, %149 in 1 : vector<8x18xf32>, vector<8x46xf32> -> vector<8x64xf32>
    %151 = arith.mulf %147, %150 : vector<8x64xf32>
    %152 = arith.addf %96, %151 : vector<8x64xf32>
    %153 = vector.extract_strided_slice %14 {offsets = [19, 0, 0], sizes = [1, 8, 64], strides = [1, 1, 1]} : vector<64x8x64xf32> to vector<1x8x64xf32>
    %154 = vector.shape_cast %153 : vector<1x8x64xf32> to vector<8x64xf32>
    %155 = vector.extract_strided_slice %10 {offsets = [0, 45], sizes = [8, 19], strides = [1, 1]} : vector<8x64xf32> to vector<8x19xf32>
    %156 = vector.extract_strided_slice %10 {offsets = [0, 0], sizes = [8, 45], strides = [1, 1]} : vector<8x64xf32> to vector<8x45xf32>
    %157 = tpu.concatenate %155, %156 in 1 : vector<8x19xf32>, vector<8x45xf32> -> vector<8x64xf32>
    %158 = arith.mulf %154, %157 : vector<8x64xf32>
    %159 = arith.addf %103, %158 : vector<8x64xf32>
    %160 = vector.extract_strided_slice %14 {offsets = [20, 0, 0], sizes = [1, 8, 64], strides = [1, 1, 1]} : vector<64x8x64xf32> to vector<1x8x64xf32>
    %161 = vector.shape_cast %160 : vector<1x8x64xf32> to vector<8x64xf32>
    %162 = vector.extract_strided_slice %10 {offsets = [0, 44], sizes = [8, 20], strides = [1, 1]} : vector<8x64xf32> to vector<8x20xf32>
    %163 = vector.extract_strided_slice %10 {offsets = [0, 0], sizes = [8, 44], strides = [1, 1]} : vector<8x64xf32> to vector<8x44xf32>
    %164 = tpu.concatenate %162, %163 in 1 : vector<8x20xf32>, vector<8x44xf32> -> vector<8x64xf32>
    %165 = arith.mulf %161, %164 : vector<8x64xf32>
    %166 = arith.addf %110, %165 : vector<8x64xf32>
    %167 = vector.extract_strided_slice %14 {offsets = [21, 0, 0], sizes = [1, 8, 64], strides = [1, 1, 1]} : vector<64x8x64xf32> to vector<1x8x64xf32>
    %168 = vector.shape_cast %167 : vector<1x8x64xf32> to vector<8x64xf32>
    %169 = vector.extract_strided_slice %10 {offsets = [0, 43], sizes = [8, 21], strides = [1, 1]} : vector<8x64xf32> to vector<8x21xf32>
    %170 = vector.extract_strided_slice %10 {offsets = [0, 0], sizes = [8, 43], strides = [1, 1]} : vector<8x64xf32> to vector<8x43xf32>
    %171 = tpu.concatenate %169, %170 in 1 : vector<8x21xf32>, vector<8x43xf32> -> vector<8x64xf32>
    %172 = arith.mulf %168, %171 : vector<8x64xf32>
    %173 = arith.addf %117, %172 : vector<8x64xf32>
    %174 = vector.extract_strided_slice %14 {offsets = [22, 0, 0], sizes = [1, 8, 64], strides = [1, 1, 1]} : vector<64x8x64xf32> to vector<1x8x64xf32>
    %175 = vector.shape_cast %174 : vector<1x8x64xf32> to vector<8x64xf32>
    %176 = vector.extract_strided_slice %10 {offsets = [0, 42], sizes = [8, 22], strides = [1, 1]} : vector<8x64xf32> to vector<8x22xf32>
    %177 = vector.extract_strided_slice %10 {offsets = [0, 0], sizes = [8, 42], strides = [1, 1]} : vector<8x64xf32> to vector<8x42xf32>
    %178 = tpu.concatenate %176, %177 in 1 : vector<8x22xf32>, vector<8x42xf32> -> vector<8x64xf32>
    %179 = arith.mulf %175, %178 : vector<8x64xf32>
    %180 = arith.addf %124, %179 : vector<8x64xf32>
    %181 = vector.extract_strided_slice %14 {offsets = [23, 0, 0], sizes = [1, 8, 64], strides = [1, 1, 1]} : vector<64x8x64xf32> to vector<1x8x64xf32>
    %182 = vector.shape_cast %181 : vector<1x8x64xf32> to vector<8x64xf32>
    %183 = vector.extract_strided_slice %10 {offsets = [0, 41], sizes = [8, 23], strides = [1, 1]} : vector<8x64xf32> to vector<8x23xf32>
    %184 = vector.extract_strided_slice %10 {offsets = [0, 0], sizes = [8, 41], strides = [1, 1]} : vector<8x64xf32> to vector<8x41xf32>
    %185 = tpu.concatenate %183, %184 in 1 : vector<8x23xf32>, vector<8x41xf32> -> vector<8x64xf32>
    %186 = arith.mulf %182, %185 : vector<8x64xf32>
    %187 = arith.addf %131, %186 : vector<8x64xf32>
    %188 = vector.extract_strided_slice %14 {offsets = [24, 0, 0], sizes = [1, 8, 64], strides = [1, 1, 1]} : vector<64x8x64xf32> to vector<1x8x64xf32>
    %189 = vector.shape_cast %188 : vector<1x8x64xf32> to vector<8x64xf32>
    %190 = vector.extract_strided_slice %10 {offsets = [0, 40], sizes = [8, 24], strides = [1, 1]} : vector<8x64xf32> to vector<8x24xf32>
    %191 = vector.extract_strided_slice %10 {offsets = [0, 0], sizes = [8, 40], strides = [1, 1]} : vector<8x64xf32> to vector<8x40xf32>
    %192 = tpu.concatenate %190, %191 in 1 : vector<8x24xf32>, vector<8x40xf32> -> vector<8x64xf32>
    %193 = arith.mulf %189, %192 : vector<8x64xf32>
    %194 = arith.addf %138, %193 : vector<8x64xf32>
    %195 = vector.extract_strided_slice %14 {offsets = [25, 0, 0], sizes = [1, 8, 64], strides = [1, 1, 1]} : vector<64x8x64xf32> to vector<1x8x64xf32>
    %196 = vector.shape_cast %195 : vector<1x8x64xf32> to vector<8x64xf32>
    %197 = vector.extract_strided_slice %10 {offsets = [0, 39], sizes = [8, 25], strides = [1, 1]} : vector<8x64xf32> to vector<8x25xf32>
    %198 = vector.extract_strided_slice %10 {offsets = [0, 0], sizes = [8, 39], strides = [1, 1]} : vector<8x64xf32> to vector<8x39xf32>
    %199 = tpu.concatenate %197, %198 in 1 : vector<8x25xf32>, vector<8x39xf32> -> vector<8x64xf32>
    %200 = arith.mulf %196, %199 : vector<8x64xf32>
    %201 = arith.addf %145, %200 : vector<8x64xf32>
    %202 = vector.extract_strided_slice %14 {offsets = [26, 0, 0], sizes = [1, 8, 64], strides = [1, 1, 1]} : vector<64x8x64xf32> to vector<1x8x64xf32>
    %203 = vector.shape_cast %202 : vector<1x8x64xf32> to vector<8x64xf32>
    %204 = vector.extract_strided_slice %10 {offsets = [0, 38], sizes = [8, 26], strides = [1, 1]} : vector<8x64xf32> to vector<8x26xf32>
    %205 = vector.extract_strided_slice %10 {offsets = [0, 0], sizes = [8, 38], strides = [1, 1]} : vector<8x64xf32> to vector<8x38xf32>
    %206 = tpu.concatenate %204, %205 in 1 : vector<8x26xf32>, vector<8x38xf32> -> vector<8x64xf32>
    %207 = arith.mulf %203, %206 : vector<8x64xf32>
    %208 = arith.addf %152, %207 : vector<8x64xf32>
    %209 = vector.extract_strided_slice %14 {offsets = [27, 0, 0], sizes = [1, 8, 64], strides = [1, 1, 1]} : vector<64x8x64xf32> to vector<1x8x64xf32>
    %210 = vector.shape_cast %209 : vector<1x8x64xf32> to vector<8x64xf32>
    %211 = vector.extract_strided_slice %10 {offsets = [0, 37], sizes = [8, 27], strides = [1, 1]} : vector<8x64xf32> to vector<8x27xf32>
    %212 = vector.extract_strided_slice %10 {offsets = [0, 0], sizes = [8, 37], strides = [1, 1]} : vector<8x64xf32> to vector<8x37xf32>
    %213 = tpu.concatenate %211, %212 in 1 : vector<8x27xf32>, vector<8x37xf32> -> vector<8x64xf32>
    %214 = arith.mulf %210, %213 : vector<8x64xf32>
    %215 = arith.addf %159, %214 : vector<8x64xf32>
    %216 = vector.extract_strided_slice %14 {offsets = [28, 0, 0], sizes = [1, 8, 64], strides = [1, 1, 1]} : vector<64x8x64xf32> to vector<1x8x64xf32>
    %217 = vector.shape_cast %216 : vector<1x8x64xf32> to vector<8x64xf32>
    %218 = vector.extract_strided_slice %10 {offsets = [0, 36], sizes = [8, 28], strides = [1, 1]} : vector<8x64xf32> to vector<8x28xf32>
    %219 = vector.extract_strided_slice %10 {offsets = [0, 0], sizes = [8, 36], strides = [1, 1]} : vector<8x64xf32> to vector<8x36xf32>
    %220 = tpu.concatenate %218, %219 in 1 : vector<8x28xf32>, vector<8x36xf32> -> vector<8x64xf32>
    %221 = arith.mulf %217, %220 : vector<8x64xf32>
    %222 = arith.addf %166, %221 : vector<8x64xf32>
    %223 = vector.extract_strided_slice %14 {offsets = [29, 0, 0], sizes = [1, 8, 64], strides = [1, 1, 1]} : vector<64x8x64xf32> to vector<1x8x64xf32>
    %224 = vector.shape_cast %223 : vector<1x8x64xf32> to vector<8x64xf32>
    %225 = vector.extract_strided_slice %10 {offsets = [0, 35], sizes = [8, 29], strides = [1, 1]} : vector<8x64xf32> to vector<8x29xf32>
    %226 = vector.extract_strided_slice %10 {offsets = [0, 0], sizes = [8, 35], strides = [1, 1]} : vector<8x64xf32> to vector<8x35xf32>
    %227 = tpu.concatenate %225, %226 in 1 : vector<8x29xf32>, vector<8x35xf32> -> vector<8x64xf32>
    %228 = arith.mulf %224, %227 : vector<8x64xf32>
    %229 = arith.addf %173, %228 : vector<8x64xf32>
    %230 = vector.extract_strided_slice %14 {offsets = [30, 0, 0], sizes = [1, 8, 64], strides = [1, 1, 1]} : vector<64x8x64xf32> to vector<1x8x64xf32>
    %231 = vector.shape_cast %230 : vector<1x8x64xf32> to vector<8x64xf32>
    %232 = vector.extract_strided_slice %10 {offsets = [0, 34], sizes = [8, 30], strides = [1, 1]} : vector<8x64xf32> to vector<8x30xf32>
    %233 = vector.extract_strided_slice %10 {offsets = [0, 0], sizes = [8, 34], strides = [1, 1]} : vector<8x64xf32> to vector<8x34xf32>
    %234 = tpu.concatenate %232, %233 in 1 : vector<8x30xf32>, vector<8x34xf32> -> vector<8x64xf32>
    %235 = arith.mulf %231, %234 : vector<8x64xf32>
    %236 = arith.addf %180, %235 : vector<8x64xf32>
    %237 = vector.extract_strided_slice %14 {offsets = [31, 0, 0], sizes = [1, 8, 64], strides = [1, 1, 1]} : vector<64x8x64xf32> to vector<1x8x64xf32>
    %238 = vector.shape_cast %237 : vector<1x8x64xf32> to vector<8x64xf32>
    %239 = vector.extract_strided_slice %10 {offsets = [0, 33], sizes = [8, 31], strides = [1, 1]} : vector<8x64xf32> to vector<8x31xf32>
    %240 = vector.extract_strided_slice %10 {offsets = [0, 0], sizes = [8, 33], strides = [1, 1]} : vector<8x64xf32> to vector<8x33xf32>
    %241 = tpu.concatenate %239, %240 in 1 : vector<8x31xf32>, vector<8x33xf32> -> vector<8x64xf32>
    %242 = arith.mulf %238, %241 : vector<8x64xf32>
    %243 = arith.addf %187, %242 : vector<8x64xf32>
    %244 = vector.extract_strided_slice %14 {offsets = [32, 0, 0], sizes = [1, 8, 64], strides = [1, 1, 1]} : vector<64x8x64xf32> to vector<1x8x64xf32>
    %245 = vector.shape_cast %244 : vector<1x8x64xf32> to vector<8x64xf32>
    %246 = vector.extract_strided_slice %10 {offsets = [0, 32], sizes = [8, 32], strides = [1, 1]} : vector<8x64xf32> to vector<8x32xf32>
    %247 = vector.extract_strided_slice %10 {offsets = [0, 0], sizes = [8, 32], strides = [1, 1]} : vector<8x64xf32> to vector<8x32xf32>
    %248 = tpu.concatenate %246, %247 in 1 : vector<8x32xf32>, vector<8x32xf32> -> vector<8x64xf32>
    %249 = arith.mulf %245, %248 : vector<8x64xf32>
    %250 = arith.addf %194, %249 : vector<8x64xf32>
    %251 = vector.extract_strided_slice %14 {offsets = [33, 0, 0], sizes = [1, 8, 64], strides = [1, 1, 1]} : vector<64x8x64xf32> to vector<1x8x64xf32>
    %252 = vector.shape_cast %251 : vector<1x8x64xf32> to vector<8x64xf32>
    %253 = vector.extract_strided_slice %10 {offsets = [0, 31], sizes = [8, 33], strides = [1, 1]} : vector<8x64xf32> to vector<8x33xf32>
    %254 = vector.extract_strided_slice %10 {offsets = [0, 0], sizes = [8, 31], strides = [1, 1]} : vector<8x64xf32> to vector<8x31xf32>
    %255 = tpu.concatenate %253, %254 in 1 : vector<8x33xf32>, vector<8x31xf32> -> vector<8x64xf32>
    %256 = arith.mulf %252, %255 : vector<8x64xf32>
    %257 = arith.addf %201, %256 : vector<8x64xf32>
    %258 = vector.extract_strided_slice %14 {offsets = [34, 0, 0], sizes = [1, 8, 64], strides = [1, 1, 1]} : vector<64x8x64xf32> to vector<1x8x64xf32>
    %259 = vector.shape_cast %258 : vector<1x8x64xf32> to vector<8x64xf32>
    %260 = vector.extract_strided_slice %10 {offsets = [0, 30], sizes = [8, 34], strides = [1, 1]} : vector<8x64xf32> to vector<8x34xf32>
    %261 = vector.extract_strided_slice %10 {offsets = [0, 0], sizes = [8, 30], strides = [1, 1]} : vector<8x64xf32> to vector<8x30xf32>
    %262 = tpu.concatenate %260, %261 in 1 : vector<8x34xf32>, vector<8x30xf32> -> vector<8x64xf32>
    %263 = arith.mulf %259, %262 : vector<8x64xf32>
    %264 = arith.addf %208, %263 : vector<8x64xf32>
    %265 = vector.extract_strided_slice %14 {offsets = [35, 0, 0], sizes = [1, 8, 64], strides = [1, 1, 1]} : vector<64x8x64xf32> to vector<1x8x64xf32>
    %266 = vector.shape_cast %265 : vector<1x8x64xf32> to vector<8x64xf32>
    %267 = vector.extract_strided_slice %10 {offsets = [0, 29], sizes = [8, 35], strides = [1, 1]} : vector<8x64xf32> to vector<8x35xf32>
    %268 = vector.extract_strided_slice %10 {offsets = [0, 0], sizes = [8, 29], strides = [1, 1]} : vector<8x64xf32> to vector<8x29xf32>
    %269 = tpu.concatenate %267, %268 in 1 : vector<8x35xf32>, vector<8x29xf32> -> vector<8x64xf32>
    %270 = arith.mulf %266, %269 : vector<8x64xf32>
    %271 = arith.addf %215, %270 : vector<8x64xf32>
    %272 = vector.extract_strided_slice %14 {offsets = [36, 0, 0], sizes = [1, 8, 64], strides = [1, 1, 1]} : vector<64x8x64xf32> to vector<1x8x64xf32>
    %273 = vector.shape_cast %272 : vector<1x8x64xf32> to vector<8x64xf32>
    %274 = vector.extract_strided_slice %10 {offsets = [0, 28], sizes = [8, 36], strides = [1, 1]} : vector<8x64xf32> to vector<8x36xf32>
    %275 = vector.extract_strided_slice %10 {offsets = [0, 0], sizes = [8, 28], strides = [1, 1]} : vector<8x64xf32> to vector<8x28xf32>
    %276 = tpu.concatenate %274, %275 in 1 : vector<8x36xf32>, vector<8x28xf32> -> vector<8x64xf32>
    %277 = arith.mulf %273, %276 : vector<8x64xf32>
    %278 = arith.addf %222, %277 : vector<8x64xf32>
    %279 = vector.extract_strided_slice %14 {offsets = [37, 0, 0], sizes = [1, 8, 64], strides = [1, 1, 1]} : vector<64x8x64xf32> to vector<1x8x64xf32>
    %280 = vector.shape_cast %279 : vector<1x8x64xf32> to vector<8x64xf32>
    %281 = vector.extract_strided_slice %10 {offsets = [0, 27], sizes = [8, 37], strides = [1, 1]} : vector<8x64xf32> to vector<8x37xf32>
    %282 = vector.extract_strided_slice %10 {offsets = [0, 0], sizes = [8, 27], strides = [1, 1]} : vector<8x64xf32> to vector<8x27xf32>
    %283 = tpu.concatenate %281, %282 in 1 : vector<8x37xf32>, vector<8x27xf32> -> vector<8x64xf32>
    %284 = arith.mulf %280, %283 : vector<8x64xf32>
    %285 = arith.addf %229, %284 : vector<8x64xf32>
    %286 = vector.extract_strided_slice %14 {offsets = [38, 0, 0], sizes = [1, 8, 64], strides = [1, 1, 1]} : vector<64x8x64xf32> to vector<1x8x64xf32>
    %287 = vector.shape_cast %286 : vector<1x8x64xf32> to vector<8x64xf32>
    %288 = vector.extract_strided_slice %10 {offsets = [0, 26], sizes = [8, 38], strides = [1, 1]} : vector<8x64xf32> to vector<8x38xf32>
    %289 = vector.extract_strided_slice %10 {offsets = [0, 0], sizes = [8, 26], strides = [1, 1]} : vector<8x64xf32> to vector<8x26xf32>
    %290 = tpu.concatenate %288, %289 in 1 : vector<8x38xf32>, vector<8x26xf32> -> vector<8x64xf32>
    %291 = arith.mulf %287, %290 : vector<8x64xf32>
    %292 = arith.addf %236, %291 : vector<8x64xf32>
    %293 = vector.extract_strided_slice %14 {offsets = [39, 0, 0], sizes = [1, 8, 64], strides = [1, 1, 1]} : vector<64x8x64xf32> to vector<1x8x64xf32>
    %294 = vector.shape_cast %293 : vector<1x8x64xf32> to vector<8x64xf32>
    %295 = vector.extract_strided_slice %10 {offsets = [0, 25], sizes = [8, 39], strides = [1, 1]} : vector<8x64xf32> to vector<8x39xf32>
    %296 = vector.extract_strided_slice %10 {offsets = [0, 0], sizes = [8, 25], strides = [1, 1]} : vector<8x64xf32> to vector<8x25xf32>
    %297 = tpu.concatenate %295, %296 in 1 : vector<8x39xf32>, vector<8x25xf32> -> vector<8x64xf32>
    %298 = arith.mulf %294, %297 : vector<8x64xf32>
    %299 = arith.addf %243, %298 : vector<8x64xf32>
    %300 = vector.extract_strided_slice %14 {offsets = [40, 0, 0], sizes = [1, 8, 64], strides = [1, 1, 1]} : vector<64x8x64xf32> to vector<1x8x64xf32>
    %301 = vector.shape_cast %300 : vector<1x8x64xf32> to vector<8x64xf32>
    %302 = vector.extract_strided_slice %10 {offsets = [0, 24], sizes = [8, 40], strides = [1, 1]} : vector<8x64xf32> to vector<8x40xf32>
    %303 = vector.extract_strided_slice %10 {offsets = [0, 0], sizes = [8, 24], strides = [1, 1]} : vector<8x64xf32> to vector<8x24xf32>
    %304 = tpu.concatenate %302, %303 in 1 : vector<8x40xf32>, vector<8x24xf32> -> vector<8x64xf32>
    %305 = arith.mulf %301, %304 : vector<8x64xf32>
    %306 = arith.addf %250, %305 : vector<8x64xf32>
    %307 = vector.extract_strided_slice %14 {offsets = [41, 0, 0], sizes = [1, 8, 64], strides = [1, 1, 1]} : vector<64x8x64xf32> to vector<1x8x64xf32>
    %308 = vector.shape_cast %307 : vector<1x8x64xf32> to vector<8x64xf32>
    %309 = vector.extract_strided_slice %10 {offsets = [0, 23], sizes = [8, 41], strides = [1, 1]} : vector<8x64xf32> to vector<8x41xf32>
    %310 = vector.extract_strided_slice %10 {offsets = [0, 0], sizes = [8, 23], strides = [1, 1]} : vector<8x64xf32> to vector<8x23xf32>
    %311 = tpu.concatenate %309, %310 in 1 : vector<8x41xf32>, vector<8x23xf32> -> vector<8x64xf32>
    %312 = arith.mulf %308, %311 : vector<8x64xf32>
    %313 = arith.addf %257, %312 : vector<8x64xf32>
    %314 = vector.extract_strided_slice %14 {offsets = [42, 0, 0], sizes = [1, 8, 64], strides = [1, 1, 1]} : vector<64x8x64xf32> to vector<1x8x64xf32>
    %315 = vector.shape_cast %314 : vector<1x8x64xf32> to vector<8x64xf32>
    %316 = vector.extract_strided_slice %10 {offsets = [0, 22], sizes = [8, 42], strides = [1, 1]} : vector<8x64xf32> to vector<8x42xf32>
    %317 = vector.extract_strided_slice %10 {offsets = [0, 0], sizes = [8, 22], strides = [1, 1]} : vector<8x64xf32> to vector<8x22xf32>
    %318 = tpu.concatenate %316, %317 in 1 : vector<8x42xf32>, vector<8x22xf32> -> vector<8x64xf32>
    %319 = arith.mulf %315, %318 : vector<8x64xf32>
    %320 = arith.addf %264, %319 : vector<8x64xf32>
    %321 = vector.extract_strided_slice %14 {offsets = [43, 0, 0], sizes = [1, 8, 64], strides = [1, 1, 1]} : vector<64x8x64xf32> to vector<1x8x64xf32>
    %322 = vector.shape_cast %321 : vector<1x8x64xf32> to vector<8x64xf32>
    %323 = vector.extract_strided_slice %10 {offsets = [0, 21], sizes = [8, 43], strides = [1, 1]} : vector<8x64xf32> to vector<8x43xf32>
    %324 = vector.extract_strided_slice %10 {offsets = [0, 0], sizes = [8, 21], strides = [1, 1]} : vector<8x64xf32> to vector<8x21xf32>
    %325 = tpu.concatenate %323, %324 in 1 : vector<8x43xf32>, vector<8x21xf32> -> vector<8x64xf32>
    %326 = arith.mulf %322, %325 : vector<8x64xf32>
    %327 = arith.addf %271, %326 : vector<8x64xf32>
    %328 = vector.extract_strided_slice %14 {offsets = [44, 0, 0], sizes = [1, 8, 64], strides = [1, 1, 1]} : vector<64x8x64xf32> to vector<1x8x64xf32>
    %329 = vector.shape_cast %328 : vector<1x8x64xf32> to vector<8x64xf32>
    %330 = vector.extract_strided_slice %10 {offsets = [0, 20], sizes = [8, 44], strides = [1, 1]} : vector<8x64xf32> to vector<8x44xf32>
    %331 = vector.extract_strided_slice %10 {offsets = [0, 0], sizes = [8, 20], strides = [1, 1]} : vector<8x64xf32> to vector<8x20xf32>
    %332 = tpu.concatenate %330, %331 in 1 : vector<8x44xf32>, vector<8x20xf32> -> vector<8x64xf32>
    %333 = arith.mulf %329, %332 : vector<8x64xf32>
    %334 = arith.addf %278, %333 : vector<8x64xf32>
    %335 = vector.extract_strided_slice %14 {offsets = [45, 0, 0], sizes = [1, 8, 64], strides = [1, 1, 1]} : vector<64x8x64xf32> to vector<1x8x64xf32>
    %336 = vector.shape_cast %335 : vector<1x8x64xf32> to vector<8x64xf32>
    %337 = vector.extract_strided_slice %10 {offsets = [0, 19], sizes = [8, 45], strides = [1, 1]} : vector<8x64xf32> to vector<8x45xf32>
    %338 = vector.extract_strided_slice %10 {offsets = [0, 0], sizes = [8, 19], strides = [1, 1]} : vector<8x64xf32> to vector<8x19xf32>
    %339 = tpu.concatenate %337, %338 in 1 : vector<8x45xf32>, vector<8x19xf32> -> vector<8x64xf32>
    %340 = arith.mulf %336, %339 : vector<8x64xf32>
    %341 = arith.addf %285, %340 : vector<8x64xf32>
    %342 = vector.extract_strided_slice %14 {offsets = [46, 0, 0], sizes = [1, 8, 64], strides = [1, 1, 1]} : vector<64x8x64xf32> to vector<1x8x64xf32>
    %343 = vector.shape_cast %342 : vector<1x8x64xf32> to vector<8x64xf32>
    %344 = vector.extract_strided_slice %10 {offsets = [0, 18], sizes = [8, 46], strides = [1, 1]} : vector<8x64xf32> to vector<8x46xf32>
    %345 = vector.extract_strided_slice %10 {offsets = [0, 0], sizes = [8, 18], strides = [1, 1]} : vector<8x64xf32> to vector<8x18xf32>
    %346 = tpu.concatenate %344, %345 in 1 : vector<8x46xf32>, vector<8x18xf32> -> vector<8x64xf32>
    %347 = arith.mulf %343, %346 : vector<8x64xf32>
    %348 = arith.addf %292, %347 : vector<8x64xf32>
    %349 = vector.extract_strided_slice %14 {offsets = [47, 0, 0], sizes = [1, 8, 64], strides = [1, 1, 1]} : vector<64x8x64xf32> to vector<1x8x64xf32>
    %350 = vector.shape_cast %349 : vector<1x8x64xf32> to vector<8x64xf32>
    %351 = vector.extract_strided_slice %10 {offsets = [0, 17], sizes = [8, 47], strides = [1, 1]} : vector<8x64xf32> to vector<8x47xf32>
    %352 = vector.extract_strided_slice %10 {offsets = [0, 0], sizes = [8, 17], strides = [1, 1]} : vector<8x64xf32> to vector<8x17xf32>
    %353 = tpu.concatenate %351, %352 in 1 : vector<8x47xf32>, vector<8x17xf32> -> vector<8x64xf32>
    %354 = arith.mulf %350, %353 : vector<8x64xf32>
    %355 = arith.addf %299, %354 : vector<8x64xf32>
    %356 = vector.extract_strided_slice %14 {offsets = [48, 0, 0], sizes = [1, 8, 64], strides = [1, 1, 1]} : vector<64x8x64xf32> to vector<1x8x64xf32>
    %357 = vector.shape_cast %356 : vector<1x8x64xf32> to vector<8x64xf32>
    %358 = vector.extract_strided_slice %10 {offsets = [0, 16], sizes = [8, 48], strides = [1, 1]} : vector<8x64xf32> to vector<8x48xf32>
    %359 = vector.extract_strided_slice %10 {offsets = [0, 0], sizes = [8, 16], strides = [1, 1]} : vector<8x64xf32> to vector<8x16xf32>
    %360 = tpu.concatenate %358, %359 in 1 : vector<8x48xf32>, vector<8x16xf32> -> vector<8x64xf32>
    %361 = arith.mulf %357, %360 : vector<8x64xf32>
    %362 = arith.addf %306, %361 : vector<8x64xf32>
    %363 = vector.extract_strided_slice %14 {offsets = [49, 0, 0], sizes = [1, 8, 64], strides = [1, 1, 1]} : vector<64x8x64xf32> to vector<1x8x64xf32>
    %364 = vector.shape_cast %363 : vector<1x8x64xf32> to vector<8x64xf32>
    %365 = vector.extract_strided_slice %10 {offsets = [0, 15], sizes = [8, 49], strides = [1, 1]} : vector<8x64xf32> to vector<8x49xf32>
    %366 = vector.extract_strided_slice %10 {offsets = [0, 0], sizes = [8, 15], strides = [1, 1]} : vector<8x64xf32> to vector<8x15xf32>
    %367 = tpu.concatenate %365, %366 in 1 : vector<8x49xf32>, vector<8x15xf32> -> vector<8x64xf32>
    %368 = arith.mulf %364, %367 : vector<8x64xf32>
    %369 = arith.addf %313, %368 : vector<8x64xf32>
    %370 = vector.extract_strided_slice %14 {offsets = [50, 0, 0], sizes = [1, 8, 64], strides = [1, 1, 1]} : vector<64x8x64xf32> to vector<1x8x64xf32>
    %371 = vector.shape_cast %370 : vector<1x8x64xf32> to vector<8x64xf32>
    %372 = vector.extract_strided_slice %10 {offsets = [0, 14], sizes = [8, 50], strides = [1, 1]} : vector<8x64xf32> to vector<8x50xf32>
    %373 = vector.extract_strided_slice %10 {offsets = [0, 0], sizes = [8, 14], strides = [1, 1]} : vector<8x64xf32> to vector<8x14xf32>
    %374 = tpu.concatenate %372, %373 in 1 : vector<8x50xf32>, vector<8x14xf32> -> vector<8x64xf32>
    %375 = arith.mulf %371, %374 : vector<8x64xf32>
    %376 = arith.addf %320, %375 : vector<8x64xf32>
    %377 = vector.extract_strided_slice %14 {offsets = [51, 0, 0], sizes = [1, 8, 64], strides = [1, 1, 1]} : vector<64x8x64xf32> to vector<1x8x64xf32>
    %378 = vector.shape_cast %377 : vector<1x8x64xf32> to vector<8x64xf32>
    %379 = vector.extract_strided_slice %10 {offsets = [0, 13], sizes = [8, 51], strides = [1, 1]} : vector<8x64xf32> to vector<8x51xf32>
    %380 = vector.extract_strided_slice %10 {offsets = [0, 0], sizes = [8, 13], strides = [1, 1]} : vector<8x64xf32> to vector<8x13xf32>
    %381 = tpu.concatenate %379, %380 in 1 : vector<8x51xf32>, vector<8x13xf32> -> vector<8x64xf32>
    %382 = arith.mulf %378, %381 : vector<8x64xf32>
    %383 = arith.addf %327, %382 : vector<8x64xf32>
    %384 = vector.extract_strided_slice %14 {offsets = [52, 0, 0], sizes = [1, 8, 64], strides = [1, 1, 1]} : vector<64x8x64xf32> to vector<1x8x64xf32>
    %385 = vector.shape_cast %384 : vector<1x8x64xf32> to vector<8x64xf32>
    %386 = vector.extract_strided_slice %10 {offsets = [0, 12], sizes = [8, 52], strides = [1, 1]} : vector<8x64xf32> to vector<8x52xf32>
    %387 = vector.extract_strided_slice %10 {offsets = [0, 0], sizes = [8, 12], strides = [1, 1]} : vector<8x64xf32> to vector<8x12xf32>
    %388 = tpu.concatenate %386, %387 in 1 : vector<8x52xf32>, vector<8x12xf32> -> vector<8x64xf32>
    %389 = arith.mulf %385, %388 : vector<8x64xf32>
    %390 = arith.addf %334, %389 : vector<8x64xf32>
    %391 = vector.extract_strided_slice %14 {offsets = [53, 0, 0], sizes = [1, 8, 64], strides = [1, 1, 1]} : vector<64x8x64xf32> to vector<1x8x64xf32>
    %392 = vector.shape_cast %391 : vector<1x8x64xf32> to vector<8x64xf32>
    %393 = vector.extract_strided_slice %10 {offsets = [0, 11], sizes = [8, 53], strides = [1, 1]} : vector<8x64xf32> to vector<8x53xf32>
    %394 = vector.extract_strided_slice %10 {offsets = [0, 0], sizes = [8, 11], strides = [1, 1]} : vector<8x64xf32> to vector<8x11xf32>
    %395 = tpu.concatenate %393, %394 in 1 : vector<8x53xf32>, vector<8x11xf32> -> vector<8x64xf32>
    %396 = arith.mulf %392, %395 : vector<8x64xf32>
    %397 = arith.addf %341, %396 : vector<8x64xf32>
    %398 = vector.extract_strided_slice %14 {offsets = [54, 0, 0], sizes = [1, 8, 64], strides = [1, 1, 1]} : vector<64x8x64xf32> to vector<1x8x64xf32>
    %399 = vector.shape_cast %398 : vector<1x8x64xf32> to vector<8x64xf32>
    %400 = vector.extract_strided_slice %10 {offsets = [0, 10], sizes = [8, 54], strides = [1, 1]} : vector<8x64xf32> to vector<8x54xf32>
    %401 = vector.extract_strided_slice %10 {offsets = [0, 0], sizes = [8, 10], strides = [1, 1]} : vector<8x64xf32> to vector<8x10xf32>
    %402 = tpu.concatenate %400, %401 in 1 : vector<8x54xf32>, vector<8x10xf32> -> vector<8x64xf32>
    %403 = arith.mulf %399, %402 : vector<8x64xf32>
    %404 = arith.addf %348, %403 : vector<8x64xf32>
    %405 = vector.extract_strided_slice %14 {offsets = [55, 0, 0], sizes = [1, 8, 64], strides = [1, 1, 1]} : vector<64x8x64xf32> to vector<1x8x64xf32>
    %406 = vector.shape_cast %405 : vector<1x8x64xf32> to vector<8x64xf32>
    %407 = vector.extract_strided_slice %10 {offsets = [0, 9], sizes = [8, 55], strides = [1, 1]} : vector<8x64xf32> to vector<8x55xf32>
    %408 = vector.extract_strided_slice %10 {offsets = [0, 0], sizes = [8, 9], strides = [1, 1]} : vector<8x64xf32> to vector<8x9xf32>
    %409 = tpu.concatenate %407, %408 in 1 : vector<8x55xf32>, vector<8x9xf32> -> vector<8x64xf32>
    %410 = arith.mulf %406, %409 : vector<8x64xf32>
    %411 = arith.addf %355, %410 : vector<8x64xf32>
    %412 = vector.extract_strided_slice %14 {offsets = [56, 0, 0], sizes = [1, 8, 64], strides = [1, 1, 1]} : vector<64x8x64xf32> to vector<1x8x64xf32>
    %413 = vector.shape_cast %412 : vector<1x8x64xf32> to vector<8x64xf32>
    %414 = vector.extract_strided_slice %10 {offsets = [0, 8], sizes = [8, 56], strides = [1, 1]} : vector<8x64xf32> to vector<8x56xf32>
    %415 = vector.extract_strided_slice %10 {offsets = [0, 0], sizes = [8, 8], strides = [1, 1]} : vector<8x64xf32> to vector<8x8xf32>
    %416 = tpu.concatenate %414, %415 in 1 : vector<8x56xf32>, vector<8x8xf32> -> vector<8x64xf32>
    %417 = arith.mulf %413, %416 : vector<8x64xf32>
    %418 = arith.addf %362, %417 : vector<8x64xf32>
    %419 = vector.extract_strided_slice %14 {offsets = [57, 0, 0], sizes = [1, 8, 64], strides = [1, 1, 1]} : vector<64x8x64xf32> to vector<1x8x64xf32>
    %420 = vector.shape_cast %419 : vector<1x8x64xf32> to vector<8x64xf32>
    %421 = vector.extract_strided_slice %10 {offsets = [0, 7], sizes = [8, 57], strides = [1, 1]} : vector<8x64xf32> to vector<8x57xf32>
    %422 = vector.extract_strided_slice %10 {offsets = [0, 0], sizes = [8, 7], strides = [1, 1]} : vector<8x64xf32> to vector<8x7xf32>
    %423 = tpu.concatenate %421, %422 in 1 : vector<8x57xf32>, vector<8x7xf32> -> vector<8x64xf32>
    %424 = arith.mulf %420, %423 : vector<8x64xf32>
    %425 = arith.addf %369, %424 : vector<8x64xf32>
    %426 = vector.extract_strided_slice %14 {offsets = [58, 0, 0], sizes = [1, 8, 64], strides = [1, 1, 1]} : vector<64x8x64xf32> to vector<1x8x64xf32>
    %427 = vector.shape_cast %426 : vector<1x8x64xf32> to vector<8x64xf32>
    %428 = vector.extract_strided_slice %10 {offsets = [0, 6], sizes = [8, 58], strides = [1, 1]} : vector<8x64xf32> to vector<8x58xf32>
    %429 = vector.extract_strided_slice %10 {offsets = [0, 0], sizes = [8, 6], strides = [1, 1]} : vector<8x64xf32> to vector<8x6xf32>
    %430 = tpu.concatenate %428, %429 in 1 : vector<8x58xf32>, vector<8x6xf32> -> vector<8x64xf32>
    %431 = arith.mulf %427, %430 : vector<8x64xf32>
    %432 = arith.addf %376, %431 : vector<8x64xf32>
    %433 = vector.extract_strided_slice %14 {offsets = [59, 0, 0], sizes = [1, 8, 64], strides = [1, 1, 1]} : vector<64x8x64xf32> to vector<1x8x64xf32>
    %434 = vector.shape_cast %433 : vector<1x8x64xf32> to vector<8x64xf32>
    %435 = vector.extract_strided_slice %10 {offsets = [0, 5], sizes = [8, 59], strides = [1, 1]} : vector<8x64xf32> to vector<8x59xf32>
    %436 = vector.extract_strided_slice %10 {offsets = [0, 0], sizes = [8, 5], strides = [1, 1]} : vector<8x64xf32> to vector<8x5xf32>
    %437 = tpu.concatenate %435, %436 in 1 : vector<8x59xf32>, vector<8x5xf32> -> vector<8x64xf32>
    %438 = arith.mulf %434, %437 : vector<8x64xf32>
    %439 = arith.addf %383, %438 : vector<8x64xf32>
    %440 = vector.extract_strided_slice %14 {offsets = [60, 0, 0], sizes = [1, 8, 64], strides = [1, 1, 1]} : vector<64x8x64xf32> to vector<1x8x64xf32>
    %441 = vector.shape_cast %440 : vector<1x8x64xf32> to vector<8x64xf32>
    %442 = vector.extract_strided_slice %10 {offsets = [0, 4], sizes = [8, 60], strides = [1, 1]} : vector<8x64xf32> to vector<8x60xf32>
    %443 = vector.extract_strided_slice %10 {offsets = [0, 0], sizes = [8, 4], strides = [1, 1]} : vector<8x64xf32> to vector<8x4xf32>
    %444 = tpu.concatenate %442, %443 in 1 : vector<8x60xf32>, vector<8x4xf32> -> vector<8x64xf32>
    %445 = arith.mulf %441, %444 : vector<8x64xf32>
    %446 = arith.addf %390, %445 : vector<8x64xf32>
    %447 = vector.extract_strided_slice %14 {offsets = [61, 0, 0], sizes = [1, 8, 64], strides = [1, 1, 1]} : vector<64x8x64xf32> to vector<1x8x64xf32>
    %448 = vector.shape_cast %447 : vector<1x8x64xf32> to vector<8x64xf32>
    %449 = vector.extract_strided_slice %10 {offsets = [0, 3], sizes = [8, 61], strides = [1, 1]} : vector<8x64xf32> to vector<8x61xf32>
    %450 = vector.extract_strided_slice %10 {offsets = [0, 0], sizes = [8, 3], strides = [1, 1]} : vector<8x64xf32> to vector<8x3xf32>
    %451 = tpu.concatenate %449, %450 in 1 : vector<8x61xf32>, vector<8x3xf32> -> vector<8x64xf32>
    %452 = arith.mulf %448, %451 : vector<8x64xf32>
    %453 = arith.addf %397, %452 : vector<8x64xf32>
    %454 = vector.extract_strided_slice %14 {offsets = [62, 0, 0], sizes = [1, 8, 64], strides = [1, 1, 1]} : vector<64x8x64xf32> to vector<1x8x64xf32>
    %455 = vector.shape_cast %454 : vector<1x8x64xf32> to vector<8x64xf32>
    %456 = vector.extract_strided_slice %10 {offsets = [0, 2], sizes = [8, 62], strides = [1, 1]} : vector<8x64xf32> to vector<8x62xf32>
    %457 = vector.extract_strided_slice %10 {offsets = [0, 0], sizes = [8, 2], strides = [1, 1]} : vector<8x64xf32> to vector<8x2xf32>
    %458 = tpu.concatenate %456, %457 in 1 : vector<8x62xf32>, vector<8x2xf32> -> vector<8x64xf32>
    %459 = arith.mulf %455, %458 : vector<8x64xf32>
    %460 = arith.addf %404, %459 : vector<8x64xf32>
    %461 = vector.extract_strided_slice %14 {offsets = [63, 0, 0], sizes = [1, 8, 64], strides = [1, 1, 1]} : vector<64x8x64xf32> to vector<1x8x64xf32>
    %462 = vector.shape_cast %461 : vector<1x8x64xf32> to vector<8x64xf32>
    %463 = vector.extract_strided_slice %10 {offsets = [0, 1], sizes = [8, 63], strides = [1, 1]} : vector<8x64xf32> to vector<8x63xf32>
    %464 = vector.extract_strided_slice %10 {offsets = [0, 0], sizes = [8, 1], strides = [1, 1]} : vector<8x64xf32> to vector<8x1xf32>
    %465 = tpu.concatenate %463, %464 in 1 : vector<8x63xf32>, vector<8x1xf32> -> vector<8x64xf32>
    %466 = arith.mulf %462, %465 : vector<8x64xf32>
    %467 = arith.addf %411, %466 : vector<8x64xf32>
    %468 = arith.addf %418, %425 : vector<8x64xf32>
    %469 = arith.addf %432, %439 : vector<8x64xf32>
    %470 = arith.addf %446, %453 : vector<8x64xf32>
    %471 = arith.addf %460, %467 : vector<8x64xf32>
    %472 = arith.addf %468, %469 : vector<8x64xf32>
    %473 = arith.addf %470, %471 : vector<8x64xf32>
    %474 = arith.addf %472, %473 : vector<8x64xf32>
    %c0_15 = arith.constant 0 : index
    %c0_16 = arith.constant 0 : index
    %475 = vector.load %arg5[%c0_15, %c0_16] : memref<64x8xf32, #tpu.memory_space<vmem>>, vector<64x8xf32>
    %cst_17 = arith.constant dense<0.000000e+00> : vector<8x8xf32>
    %476 = tpu.matmul %474, %475, %cst_17 {dimension_numbers = #tpu.dot_dimension_numbers<[1], [0], [0], [1], [0, 0, 1, 1], [], []>} : vector<8x64xf32>, vector<64x8xf32>, vector<8x8xf32> -> vector<8x8xf32>
    %c0_18 = arith.constant 0 : index
    %c0_19 = arith.constant 0 : index
    %477 = vector.load %arg6[%c0_18, %c0_19] : memref<1x8xf32, #tpu.memory_space<vmem>>, vector<1x8xf32>
    %478 = vector.broadcast %477 : vector<1x8xf32> to vector<8x8xf32>
    %479 = arith.addf %476, %478 : vector<8x8xf32>
    %c0_20 = arith.constant 0 : index
    %c0_21 = arith.constant 0 : index
    %480 = vector.load %arg7[%c0_20, %c0_21] : memref<8x8xf32, #tpu.memory_space<vmem>>, vector<8x8xf32>
    tpu.vector_store %arg7[%c0_20, %c0_21], %479 {strides = array<i32>} : memref<8x8xf32, #tpu.memory_space<vmem>>, vector<8x8xf32>,
    return
  }
  func.func @transform_0(%arg0: i32) -> (i32, i32) {
    %c0_i32 = arith.constant 0 : i32
    %c0_i32_0 = arith.constant 0 : i32
    return %arg0, %c0_i32 : i32, i32
  }
  func.func @transform_1(%arg0: i32) -> (i32, i32) {
    %c0_i32 = arith.constant 0 : i32
    %c0_i32_0 = arith.constant 0 : i32
    return %arg0, %c0_i32 : i32, i32
  }
  func.func @transform_2(%arg0: i32) -> (i32, i32) {
    %c0_i32 = arith.constant 0 : i32
    %c0_i32_0 = arith.constant 0 : i32
    %c0_i32_1 = arith.constant 0 : i32
    return %c0_i32, %c0_i32_0 : i32, i32
  }
  func.func @transform_3(%arg0: i32) -> (i32, i32) {
    %c0_i32 = arith.constant 0 : i32
    %c0_i32_0 = arith.constant 0 : i32
    %c0_i32_1 = arith.constant 0 : i32
    return %c0_i32, %c0_i32_0 : i32, i32
  }
  func.func @transform_4(%arg0: i32) -> (i32, i32) {
    %c0_i32 = arith.constant 0 : i32
    %c0_i32_0 = arith.constant 0 : i32
    %c0_i32_1 = arith.constant 0 : i32
    return %c0_i32, %c0_i32_0 : i32, i32
  }
  func.func @transform_5(%arg0: i32) -> (i32, i32) {
    %c0_i32 = arith.constant 0 : i32
    %c0_i32_0 = arith.constant 0 : i32
    %c0_i32_1 = arith.constant 0 : i32
    return %c0_i32, %c0_i32_0 : i32, i32
  }
  func.func @transform_6(%arg0: i32) -> (i32, i32) {
    %c0_i32 = arith.constant 0 : i32
    %c0_i32_0 = arith.constant 0 : i32
    return %arg0, %c0_i32 : i32, i32
  }
}

</mosaic_0001>

<llo_original>
// kernel: tpu_custom_call.1
$region0: #{tpu_custom_call.1}
  #allocation0 [shape = 'u32[]', space=smem, size = 0x4, offset = 0x4, fixed_abs, tag = 'smem constant byte address 0x4 - core index']
  #allocation1 [shape = 'u32[144,128]{1,0:T(1,128)}', space=vmem, size = 0x12000, scoped, tag = 'internal scratch']
  %s0 = inlined_call_operand.vmem [shape: f32[8,32], index: 0, kind: input, shape index: {}]
  %s1 = inlined_call_operand.vmem [shape: f32[8,32], index: 1, kind: input, shape index: {}]
  %s2 = inlined_call_operand.vmem [shape: f32[32,64], index: 2, kind: input, shape index: {}]
  %s3 = inlined_call_operand.vmem [shape: f32[1,64], index: 3, kind: input, shape index: {}]
  %s4 = inlined_call_operand.vmem [shape: f32[64,8], index: 4, kind: input, shape index: {}]
  %s5 = inlined_call_operand.vmem [shape: f32[1,8], index: 5, kind: input, shape index: {}]
  %s6 = inlined_call_operand.hbm [shape: f32[8,8], index: 6, kind: output, shape index: {}]
  %s7 = sld [smem:[#allocation0]]
  $region34: #{tpu_custom_call.1} parent=0
    _
  %s9 = ssub.s32 1, %s7
  %s10 = scalar_select 0, %s9, %s7
  $region1: #{tpu_custom_call.1} parent=0
    #allocation2 [shape = 'u8[4096]{0}', space=vmem, size = 0x1000, scoped, tag = 'output window, operand 0, single buffered']
    #allocation3 [shape = 's32[1]{0}', space=sflag, size = 0x4, scoped, tag = 'scoped memory for tpu_custom_call.1']
    %11 = vsyncpa [#allocation3], 0
    // Predicated region
    $region2: #{tpu_custom_call.1} parent=1 // pred_check
      _
    $region3: #{tpu_custom_call.1} parent=1 // pred_check_branch
      %13 = sbr.rel (0) target = $region5
    $region4: #{tpu_custom_call.1} parent=1 // pred_region
      _
    $region5: #{tpu_custom_call.1} parent=1 // pred_fallthru
      _
    // Predicated region
    $region6: #{tpu_custom_call.1} parent=1 // pred_check
      _
    $region7: #{tpu_custom_call.1} parent=1 // pred_check_branch
      %15 = sbr.rel (0) target = $region9
    $region8: #{tpu_custom_call.1} parent=1 // pred_region
      _
    $region9: #{tpu_custom_call.1} parent=1 // pred_fallthru
      _
    // Predicated region
    $region10: #{tpu_custom_call.1} parent=1 // pred_check
      _
    $region11: #{tpu_custom_call.1} parent=1 // pred_check_branch
      %17 = sbr.rel (0) target = $region13
    $region12: #{tpu_custom_call.1} parent=1 // pred_region
      _
    $region13: #{tpu_custom_call.1} parent=1 // pred_fallthru
      _
    // Predicated region
    $region14: #{tpu_custom_call.1} parent=1 // pred_check
      _
    $region15: #{tpu_custom_call.1} parent=1 // pred_check_branch
      %19 = sbr.rel (0) target = $region17
    $region16: #{tpu_custom_call.1} parent=1 // pred_region
      _
    $region17: #{tpu_custom_call.1} parent=1 // pred_fallthru
      _
    // Predicated region
    $region18: #{tpu_custom_call.1} parent=1 // pred_check
      _
    $region19: #{tpu_custom_call.1} parent=1 // pred_check_branch
      %21 = sbr.rel (0) target = $region21
    $region20: #{tpu_custom_call.1} parent=1 // pred_region
      _
    $region21: #{tpu_custom_call.1} parent=1 // pred_fallthru
      _
    // Predicated region
    $region22: #{tpu_custom_call.1} parent=1 // pred_check
      _
    $region23: #{tpu_custom_call.1} parent=1 // pred_check_branch
      %23 = sbr.rel (0) target = $region25
    $region24: #{tpu_custom_call.1} parent=1 // pred_region
      _
    $region25: #{tpu_custom_call.1} parent=1 // pred_fallthru
      _
    %v24 = vld [vmem:[%s0] sm:$0xff]
    %v25 = vld [vmem:[%s1] sm:$0xff]
    %v26 = vld [vmem:[%s2] sm:$0xff]
    %v27 = vld [vmem:[%s2 + $0x8] sm:$0xff]
    %v28 = vld [vmem:[%s2 + $0x10] sm:$0xff]
    %v29 = vld [vmem:[%s2 + $0x18] sm:$0xff]
    %v30 = vld [vmem:[%s3] sm:$0x1]
    %v32 = vlaneseq
    %v33 = vshrl.u32 %v32, 7
    %v34 = vsub.s32 0, %v33
    %v35 = vrot.slane %v30, %v34
    %vm37 = vcmask 261120
    %v39 = vsel %vm37, %v24, 0
    %v42 = vsel %vm37, %v25, 0
    %44 = vmatprep.subr.mxu0 0.0
    %45 = vmatpush1.msra.mxu0 0.0
    %46 = vmatprep.subr.mxu0 0.0
    %47 = vmatpush1.msra.mxu0 0.0
    %48 = vmatprep.subr.mxu0 0.0
    %49 = vmatpush1.msra.mxu0 0.0
    %50 = vmatprep.subr.mxu0 0.0
    %51 = vmatpush1.msra.mxu0 0.0
    %52 = vmatprep.subr.mxu0 0.0
    %53 = vmatpush1.msra.mxu0 0.0
    %54 = vmatprep.subr.mxu0 0.0
    %55 = vmatpush1.msra.mxu0 0.0
    %56 = vmatprep.subr.mxu0 0.0
    %57 = vmatpush1.msra.mxu0 0.0
    %58 = vmatprep.subr.mxu0 0.0
    %59 = vmatpush1.msra.mxu0 0.0
    %60 = vmatprep.subr.mxu0 0.0
    %61 = vmatpush1.msra.mxu0 0.0
    %62 = vmatprep.subr.mxu0 0.0
    %63 = vmatpush1.msra.mxu0 0.0
    %64 = vmatprep.subr.mxu0 0.0
    %65 = vmatpush1.msra.mxu0 0.0
    %66 = vmatprep.subr.mxu0 0.0
    %67 = vmatpush1.msra.mxu0 0.0
    %68 = vmatprep.subr.mxu0 0.0
    %69 = vmatpush1.msra.mxu0 %v29
    %70 = vmatprep.subr.mxu0 0.0
    %71 = vmatpush1.msra.mxu0 %v28
    %72 = vmatprep.subr.mxu0 0.0
    %73 = vmatpush1.msra.mxu0 %v27
    %74 = vmatprep.subr.mxu0 0.0
    %75 = vmatpush1.msra.mxu0 %v26
    %76 = vmatprep.subr.mxu0 0.0
    %77 = vmatpush2.msra.mxu0 0.0
    %78 = vmatprep.subr.mxu0 0.0
    %79 = vmatpush2.msra.mxu0 0.0
    %80 = vmatprep.subr.mxu0 0.0
    %81 = vmatpush2.msra.mxu0 0.0
    %82 = vmatprep.subr.mxu0 0.0
    %83 = vmatpush2.msra.mxu0 0.0
    %84 = vmatprep.subr.mxu0 0.0
    %85 = vmatpush2.msra.mxu0 0.0
    %86 = vmatprep.subr.mxu0 0.0
    %87 = vmatpush2.msra.mxu0 0.0
    %88 = vmatprep.subr.mxu0 0.0
    %89 = vmatpush2.msra.mxu0 0.0
    %90 = vmatprep.subr.mxu0 0.0
    %91 = vmatpush2.msra.mxu0 0.0
    %92 = vmatprep.subr.mxu0 0.0
    %93 = vmatpush2.msra.mxu0 0.0
    %94 = vmatprep.subr.mxu0 0.0
    %95 = vmatpush2.msra.mxu0 0.0
    %96 = vmatprep.subr.mxu0 0.0
    %97 = vmatpush2.msra.mxu0 0.0
    %98 = vmatprep.subr.mxu0 0.0
    %99 = vmatpush2.msra.mxu0 0.0
    %100 = vmatprep.subr.mxu0 0.0
    %101 = vmatpush2.msra.mxu0 0.0
    %102 = vmatprep.subr.mxu0 0.0
    %103 = vmatpush2.msra.mxu0 0.0
    %104 = vmatprep.subr.mxu0 0.0
    %105 = vmatpush2.msra.mxu0 0.0
    %106 = vmatprep.subr.mxu0 0.0
    %107 = vmatpush2.msra.mxu0 0.0
    %108 = vmatprep.mubr.f32.mxu0 0.0
    %109 = vmatmul.mubr.f32.gmra.mxu0 %v39
    %v110 = vpop.f32.mrf.mxu0
    %v111 = vadd.f32 %v35, %v110
    %v112 = vpop.f32.mrf.mxu0
    %113 = vmatprep.mubr.f32.mxu0 0.0
    %114 = vmatmul.mubr.f32.gmra.mxu0 %v42
    %v115 = vpop.f32.mrf.mxu0
    %v116 = vadd.f32 %v35, %v115
    %v117 = vpop.f32.mrf.mxu0
    %118 = vdwg.mxu0
    %v119 = vtanh.pop %v111
    %v120 = vtanh.pop %v116
    %121 = vxpose.xlu0.b32.start [1/16] %v119, 128
    %122 = vxpose.xlu0.b32.cont [2/16] 0.0, 128
    %123 = vxpose.xlu0.b32.cont [3/16] 0.0, 128
    %124 = vxpose.xlu0.b32.cont [4/16] 0.0, 128
    %125 = vxpose.xlu0.b32.cont [5/16] 0.0, 128
    %126 = vxpose.xlu0.b32.cont [6/16] 0.0, 128
    %127 = vxpose.xlu0.b32.cont [7/16] 0.0, 128
    %128 = vxpose.xlu0.b32.cont [8/16] 0.0, 128
    %129 = vxpose.xlu0.b32.cont [9/16] 0.0, 128
    %130 = vxpose.xlu0.b32.cont [10/16] 0.0, 128
    %131 = vxpose.xlu0.b32.cont [11/16] 0.0, 128
    %132 = vxpose.xlu0.b32.cont [12/16] 0.0, 128
    %133 = vxpose.xlu0.b32.cont [13/16] 0.0, 128
    %134 = vxpose.xlu0.b32.cont [14/16] 0.0, 128
    %135 = vxpose.xlu0.b32.cont [15/16] 0.0, 128
    %136 = vxpose.xlu0.b32.end [16/16] 0.0, 128
    %v137 = vpop.trf.xlu0
    %v138 = vpop.trf.xlu0
    %v139 = vpop.trf.xlu0
    %v140 = vpop.trf.xlu0
    %v141 = vpop.trf.xlu0
    %v142 = vpop.trf.xlu0
    %v143 = vpop.trf.xlu0
    %v144 = vpop.trf.xlu0
    %v145 = vpop.trf.xlu0
    %v146 = vpop.trf.xlu0
    %v147 = vpop.trf.xlu0
    %v148 = vpop.trf.xlu0
    %v149 = vpop.trf.xlu0
    %v150 = vpop.trf.xlu0
    %v151 = vpop.trf.xlu0
    %v152 = vpop.trf.xlu0
    %v153 = vlaneseq
    %v154 = vshrl.u32 %v153, 7
    %v155 = vsub.s32 0, %v154
    %v156 = vrot.slane %v137, %v155
    %158 = vbcast.lane.b32.xlu0 %v156, 256
    %v159 = vpop.permute.xlu0 %158
    %v160 = vlaneseq
    %v161 = vshrl.u32 %v160, 7
    %v162 = vsub.s32 1, %v161
    %v163 = vrot.slane %v137, %v162
    %165 = vbcast.lane.b32.xlu0 %v163, 256
    %v166 = vpop.permute.xlu0 %165
    %v167 = vlaneseq
    %v168 = vshrl.u32 %v167, 7
    %v169 = vsub.s32 2, %v168
    %v170 = vrot.slane %v137, %v169
    %172 = vbcast.lane.b32.xlu0 %v170, 256
    %v173 = vpop.permute.xlu0 %172
    %v174 = vlaneseq
    %v175 = vshrl.u32 %v174, 7
    %v176 = vsub.s32 3, %v175
    %v177 = vrot.slane %v137, %v176
    %179 = vbcast.lane.b32.xlu0 %v177, 256
    %v180 = vpop.permute.xlu0 %179
    %v181 = vlaneseq
    %v182 = vshrl.u32 %v181, 7
    %v183 = vsub.s32 4, %v182
    %v184 = vrot.slane %v137, %v183
    %186 = vbcast.lane.b32.xlu0 %v184, 256
    %v187 = vpop.permute.xlu0 %186
    %v188 = vlaneseq
    %v189 = vshrl.u32 %v188, 7
    %v190 = vsub.s32 5, %v189
    %v191 = vrot.slane %v137, %v190
    %193 = vbcast.lane.b32.xlu0 %v191, 256
    %v194 = vpop.permute.xlu0 %193
    %v195 = vlaneseq
    %v196 = vshrl.u32 %v195, 7
    %v197 = vsub.s32 6, %v196
    %v198 = vrot.slane %v137, %v197
    %200 = vbcast.lane.b32.xlu0 %v198, 256
    %v201 = vpop.permute.xlu0 %200
    %v202 = vlaneseq
    %v203 = vshrl.u32 %v202, 7
    %v204 = vsub.s32 7, %v203
    %v205 = vrot.slane %v137, %v204
    %207 = vbcast.lane.b32.xlu0 %v205, 256
    %v208 = vpop.permute.xlu0 %207
    %v209 = vlaneseq
    %v210 = vshrl.u32 %v209, 7
    %v211 = vsub.s32 0, %v210
    %v212 = vrot.slane %v138, %v211
    %214 = vbcast.lane.b32.xlu0 %v212, 256
    %v215 = vpop.permute.xlu0 %214
    %v216 = vlaneseq
    %v217 = vshrl.u32 %v216, 7
    %v218 = vsub.s32 1, %v217
    %v219 = vrot.slane %v138, %v218
    %221 = vbcast.lane.b32.xlu0 %v219, 256
    %v222 = vpop.permute.xlu0 %221
    %v223 = vlaneseq
    %v224 = vshrl.u32 %v223, 7
    %v225 = vsub.s32 2, %v224
    %v226 = vrot.slane %v138, %v225
    %228 = vbcast.lane.b32.xlu0 %v226, 256
    %v229 = vpop.permute.xlu0 %228
    %v230 = vlaneseq
    %v231 = vshrl.u32 %v230, 7
    %v232 = vsub.s32 3, %v231
    %v233 = vrot.slane %v138, %v232
    %235 = vbcast.lane.b32.xlu0 %v233, 256
    %v236 = vpop.permute.xlu0 %235
    %v237 = vlaneseq
    %v238 = vshrl.u32 %v237, 7
    %v239 = vsub.s32 4, %v238
    %v240 = vrot.slane %v138, %v239
    %242 = vbcast.lane.b32.xlu0 %v240, 256
    %v243 = vpop.permute.xlu0 %242
    %v244 = vlaneseq
    %v245 = vshrl.u32 %v244, 7
    %v246 = vsub.s32 5, %v245
    %v247 = vrot.slane %v138, %v246
    %249 = vbcast.lane.b32.xlu0 %v247, 256
    %v250 = vpop.permute.xlu0 %249
    %v251 = vlaneseq
    %v252 = vshrl.u32 %v251, 7
    %v253 = vsub.s32 6, %v252
    %v254 = vrot.slane %v138, %v253
    %256 = vbcast.lane.b32.xlu0 %v254, 256
    %v257 = vpop.permute.xlu0 %256
    %v258 = vlaneseq
    %v259 = vshrl.u32 %v258, 7
    %v260 = vsub.s32 7, %v259
    %v261 = vrot.slane %v138, %v260
    %263 = vbcast.lane.b32.xlu0 %v261, 256
    %v264 = vpop.permute.xlu0 %263
    %v265 = vlaneseq
    %v266 = vshrl.u32 %v265, 7
    %v267 = vsub.s32 0, %v266
    %v268 = vrot.slane %v139, %v267
    %270 = vbcast.lane.b32.xlu0 %v268, 256
    %v271 = vpop.permute.xlu0 %270
    %v272 = vlaneseq
    %v273 = vshrl.u32 %v272, 7
    %v274 = vsub.s32 1, %v273
    %v275 = vrot.slane %v139, %v274
    %277 = vbcast.lane.b32.xlu0 %v275, 256
    %v278 = vpop.permute.xlu0 %277
    %v279 = vlaneseq
    %v280 = vshrl.u32 %v279, 7
    %v281 = vsub.s32 2, %v280
    %v282 = vrot.slane %v139, %v281
    %284 = vbcast.lane.b32.xlu0 %v282, 256
    %v285 = vpop.permute.xlu0 %284
    %v286 = vlaneseq
    %v287 = vshrl.u32 %v286, 7
    %v288 = vsub.s32 3, %v287
    %v289 = vrot.slane %v139, %v288
    %291 = vbcast.lane.b32.xlu0 %v289, 256
    %v292 = vpop.permute.xlu0 %291
    %v293 = vlaneseq
    %v294 = vshrl.u32 %v293, 7
    %v295 = vsub.s32 4, %v294
    %v296 = vrot.slane %v139, %v295
    %298 = vbcast.lane.b32.xlu0 %v296, 256
    %v299 = vpop.permute.xlu0 %298
    %v300 = vlaneseq
    %v301 = vshrl.u32 %v300, 7
    %v302 = vsub.s32 5, %v301
    %v303 = vrot.slane %v139, %v302
    %305 = vbcast.lane.b32.xlu0 %v303, 256
    %v306 = vpop.permute.xlu0 %305
    %v307 = vlaneseq
    %v308 = vshrl.u32 %v307, 7
    %v309 = vsub.s32 6, %v308
    %v310 = vrot.slane %v139, %v309
    %312 = vbcast.lane.b32.xlu0 %v310, 256
    %v313 = vpop.permute.xlu0 %312
    %v314 = vlaneseq
    %v315 = vshrl.u32 %v314, 7
    %v316 = vsub.s32 7, %v315
    %v317 = vrot.slane %v139, %v316
    %319 = vbcast.lane.b32.xlu0 %v317, 256
    %v320 = vpop.permute.xlu0 %319
    %v321 = vlaneseq
    %v322 = vshrl.u32 %v321, 7
    %v323 = vsub.s32 0, %v322
    %v324 = vrot.slane %v140, %v323
    %326 = vbcast.lane.b32.xlu0 %v324, 256
    %v327 = vpop.permute.xlu0 %326
    %v328 = vlaneseq
    %v329 = vshrl.u32 %v328, 7
    %v330 = vsub.s32 1, %v329
    %v331 = vrot.slane %v140, %v330
    %333 = vbcast.lane.b32.xlu0 %v331, 256
    %v334 = vpop.permute.xlu0 %333
    %v335 = vlaneseq
    %v336 = vshrl.u32 %v335, 7
    %v337 = vsub.s32 2, %v336
    %v338 = vrot.slane %v140, %v337
    %340 = vbcast.lane.b32.xlu0 %v338, 256
    %v341 = vpop.permute.xlu0 %340
    %v342 = vlaneseq
    %v343 = vshrl.u32 %v342, 7
    %v344 = vsub.s32 3, %v343
    %v345 = vrot.slane %v140, %v344
    %347 = vbcast.lane.b32.xlu0 %v345, 256
    %v348 = vpop.permute.xlu0 %347
    %v349 = vlaneseq
    %v350 = vshrl.u32 %v349, 7
    %v351 = vsub.s32 4, %v350
    %v352 = vrot.slane %v140, %v351
    %354 = vbcast.lane.b32.xlu0 %v352, 256
    %v355 = vpop.permute.xlu0 %354
    %v356 = vlaneseq
    %v357 = vshrl.u32 %v356, 7
    %v358 = vsub.s32 5, %v357
    %v359 = vrot.slane %v140, %v358
    %361 = vbcast.lane.b32.xlu0 %v359, 256
    %v362 = vpop.permute.xlu0 %361
    %v363 = vlaneseq
    %v364 = vshrl.u32 %v363, 7
    %v365 = vsub.s32 6, %v364
    %v366 = vrot.slane %v140, %v365
    %368 = vbcast.lane.b32.xlu0 %v366, 256
    %v369 = vpop.permute.xlu0 %368
    %v370 = vlaneseq
    %v371 = vshrl.u32 %v370, 7
    %v372 = vsub.s32 7, %v371
    %v373 = vrot.slane %v140, %v372
    %375 = vbcast.lane.b32.xlu0 %v373, 256
    %v376 = vpop.permute.xlu0 %375
    %v377 = vlaneseq
    %v378 = vshrl.u32 %v377, 7
    %v379 = vsub.s32 0, %v378
    %v380 = vrot.slane %v141, %v379
    %382 = vbcast.lane.b32.xlu0 %v380, 256
    %v383 = vpop.permute.xlu0 %382
    %v384 = vlaneseq
    %v385 = vshrl.u32 %v384, 7
    %v386 = vsub.s32 1, %v385
    %v387 = vrot.slane %v141, %v386
    %389 = vbcast.lane.b32.xlu0 %v387, 256
    %v390 = vpop.permute.xlu0 %389
    %v391 = vlaneseq
    %v392 = vshrl.u32 %v391, 7
    %v393 = vsub.s32 2, %v392
    %v394 = vrot.slane %v141, %v393
    %396 = vbcast.lane.b32.xlu0 %v394, 256
    %v397 = vpop.permute.xlu0 %396
    %v398 = vlaneseq
    %v399 = vshrl.u32 %v398, 7
    %v400 = vsub.s32 3, %v399
    %v401 = vrot.slane %v141, %v400
    %403 = vbcast.lane.b32.xlu0 %v401, 256
    %v404 = vpop.permute.xlu0 %403
    %v405 = vlaneseq
    %v406 = vshrl.u32 %v405, 7
    %v407 = vsub.s32 4, %v406
    %v408 = vrot.slane %v141, %v407
    %410 = vbcast.lane.b32.xlu0 %v408, 256
    %v411 = vpop.permute.xlu0 %410
    %v412 = vlaneseq
    %v413 = vshrl.u32 %v412, 7
    %v414 = vsub.s32 5, %v413
    %v415 = vrot.slane %v141, %v414
    %417 = vbcast.lane.b32.xlu0 %v415, 256
    %v418 = vpop.permute.xlu0 %417
    %v419 = vlaneseq
    %v420 = vshrl.u32 %v419, 7
    %v421 = vsub.s32 6, %v420
    %v422 = vrot.slane %v141, %v421
    %424 = vbcast.lane.b32.xlu0 %v422, 256
    %v425 = vpop.permute.xlu0 %424
    %v426 = vlaneseq
    %v427 = vshrl.u32 %v426, 7
    %v428 = vsub.s32 7, %v427
    %v429 = vrot.slane %v141, %v428
    %431 = vbcast.lane.b32.xlu0 %v429, 256
    %v432 = vpop.permute.xlu0 %431
    %v433 = vlaneseq
    %v434 = vshrl.u32 %v433, 7
    %v435 = vsub.s32 0, %v434
    %v436 = vrot.slane %v142, %v435
    %438 = vbcast.lane.b32.xlu0 %v436, 256
    %v439 = vpop.permute.xlu0 %438
    %v440 = vlaneseq
    %v441 = vshrl.u32 %v440, 7
    %v442 = vsub.s32 1, %v441
    %v443 = vrot.slane %v142, %v442
    %445 = vbcast.lane.b32.xlu0 %v443, 256
    %v446 = vpop.permute.xlu0 %445
    %v447 = vlaneseq
    %v448 = vshrl.u32 %v447, 7
    %v449 = vsub.s32 2, %v448
    %v450 = vrot.slane %v142, %v449
    %452 = vbcast.lane.b32.xlu0 %v450, 256
    %v453 = vpop.permute.xlu0 %452
    %v454 = vlaneseq
    %v455 = vshrl.u32 %v454, 7
    %v456 = vsub.s32 3, %v455
    %v457 = vrot.slane %v142, %v456
    %459 = vbcast.lane.b32.xlu0 %v457, 256
    %v460 = vpop.permute.xlu0 %459
    %v461 = vlaneseq
    %v462 = vshrl.u32 %v461, 7
    %v463 = vsub.s32 4, %v462
    %v464 = vrot.slane %v142, %v463
    %466 = vbcast.lane.b32.xlu0 %v464, 256
    %v467 = vpop.permute.xlu0 %466
    %v468 = vlaneseq
    %v469 = vshrl.u32 %v468, 7
    %v470 = vsub.s32 5, %v469
    %v471 = vrot.slane %v142, %v470
    %473 = vbcast.lane.b32.xlu0 %v471, 256
    %v474 = vpop.permute.xlu0 %473
    %v475 = vlaneseq
    %v476 = vshrl.u32 %v475, 7
    %v477 = vsub.s32 6, %v476
    %v478 = vrot.slane %v142, %v477
    %480 = vbcast.lane.b32.xlu0 %v478, 256
    %v481 = vpop.permute.xlu0 %480
    %v482 = vlaneseq
    %v483 = vshrl.u32 %v482, 7
    %v484 = vsub.s32 7, %v483
    %v485 = vrot.slane %v142, %v484
    %487 = vbcast.lane.b32.xlu0 %v485, 256
    %v488 = vpop.permute.xlu0 %487
    %v489 = vlaneseq
    %v490 = vshrl.u32 %v489, 7
    %v491 = vsub.s32 0, %v490
    %v492 = vrot.slane %v143, %v491
    %494 = vbcast.lane.b32.xlu0 %v492, 256
    %v495 = vpop.permute.xlu0 %494
    %v496 = vlaneseq
    %v497 = vshrl.u32 %v496, 7
    %v498 = vsub.s32 1, %v497
    %v499 = vrot.slane %v143, %v498
    %501 = vbcast.lane.b32.xlu0 %v499, 256
    %v502 = vpop.permute.xlu0 %501
    %v503 = vlaneseq
    %v504 = vshrl.u32 %v503, 7
    %v505 = vsub.s32 2, %v504
    %v506 = vrot.slane %v143, %v505
    %508 = vbcast.lane.b32.xlu0 %v506, 256
    %v509 = vpop.permute.xlu0 %508
    %v510 = vlaneseq
    %v511 = vshrl.u32 %v510, 7
    %v512 = vsub.s32 3, %v511
    %v513 = vrot.slane %v143, %v512
    %515 = vbcast.lane.b32.xlu0 %v513, 256
    %v516 = vpop.permute.xlu0 %515
    %v517 = vlaneseq
    %v518 = vshrl.u32 %v517, 7
    %v519 = vsub.s32 4, %v518
    %v520 = vrot.slane %v143, %v519
    %522 = vbcast.lane.b32.xlu0 %v520, 256
    %v523 = vpop.permute.xlu0 %522
    %v524 = vlaneseq
    %v525 = vshrl.u32 %v524, 7
    %v526 = vsub.s32 5, %v525
    %v527 = vrot.slane %v143, %v526
    %529 = vbcast.lane.b32.xlu0 %v527, 256
    %v530 = vpop.permute.xlu0 %529
    %v531 = vlaneseq
    %v532 = vshrl.u32 %v531, 7
    %v533 = vsub.s32 6, %v532
    %v534 = vrot.slane %v143, %v533
    %536 = vbcast.lane.b32.xlu0 %v534, 256
    %v537 = vpop.permute.xlu0 %536
    %v538 = vlaneseq
    %v539 = vshrl.u32 %v538, 7
    %v540 = vsub.s32 7, %v539
    %v541 = vrot.slane %v143, %v540
    %543 = vbcast.lane.b32.xlu0 %v541, 256
    %v544 = vpop.permute.xlu0 %543
    %v545 = vlaneseq
    %v546 = vshrl.u32 %v545, 7
    %v547 = vsub.s32 0, %v546
    %v548 = vrot.slane %v144, %v547
    %550 = vbcast.lane.b32.xlu0 %v548, 256
    %v551 = vpop.permute.xlu0 %550
    %v552 = vlaneseq
    %v553 = vshrl.u32 %v552, 7
    %v554 = vsub.s32 1, %v553
    %v555 = vrot.slane %v144, %v554
    %557 = vbcast.lane.b32.xlu0 %v555, 256
    %v558 = vpop.permute.xlu0 %557
    %v559 = vlaneseq
    %v560 = vshrl.u32 %v559, 7
    %v561 = vsub.s32 2, %v560
    %v562 = vrot.slane %v144, %v561
    %564 = vbcast.lane.b32.xlu0 %v562, 256
    %v565 = vpop.permute.xlu0 %564
    %v566 = vlaneseq
    %v567 = vshrl.u32 %v566, 7
    %v568 = vsub.s32 3, %v567
    %v569 = vrot.slane %v144, %v568
    %571 = vbcast.lane.b32.xlu0 %v569, 256
    %v572 = vpop.permute.xlu0 %571
    %v573 = vlaneseq
    %v574 = vshrl.u32 %v573, 7
    %v575 = vsub.s32 4, %v574
    %v576 = vrot.slane %v144, %v575
    %578 = vbcast.lane.b32.xlu0 %v576, 256
    %v579 = vpop.permute.xlu0 %578
    %v580 = vlaneseq
    %v581 = vshrl.u32 %v580, 7
    %v582 = vsub.s32 5, %v581
    %v583 = vrot.slane %v144, %v582
    %585 = vbcast.lane.b32.xlu0 %v583, 256
    %v586 = vpop.permute.xlu0 %585
    %v587 = vlaneseq
    %v588 = vshrl.u32 %v587, 7
    %v589 = vsub.s32 6, %v588
    %v590 = vrot.slane %v144, %v589
    %592 = vbcast.lane.b32.xlu0 %v590, 256
    %v593 = vpop.permute.xlu0 %592
    %v594 = vlaneseq
    %v595 = vshrl.u32 %v594, 7
    %v596 = vsub.s32 7, %v595
    %v597 = vrot.slane %v144, %v596
    %599 = vbcast.lane.b32.xlu0 %v597, 256
    %v600 = vpop.permute.xlu0 %599
    %v601 = vmul.f32 %v159, %v120
    %v602 = vadd.f32 %v601, 0.0
    %604 = vrot.lane.b32.xlu0 %v120, 65
    %v605 = vpop.permute.xlu0 %604
    %607 = vrot.lane.b32.xlu0 %v120, 1
    %v608 = vpop.permute.xlu0 %607
    %vm610 = vcmask 7168
    %v611 = vsel %vm610, %v605, %v608
    %v612 = vmul.f32 %v166, %v611
    %v613 = vadd.f32 %v612, 0.0
    %614 = vrot.lane.b32.xlu0 %v120, 66
    %v615 = vpop.permute.xlu0 %614
    %617 = vrot.lane.b32.xlu0 %v120, 2
    %v618 = vpop.permute.xlu0 %617
    %vm620 = vcmask 15360
    %v621 = vsel %vm620, %v615, %v618
    %v622 = vmul.f32 %v173, %v621
    %v623 = vadd.f32 %v622, 0.0
    %624 = vrot.lane.b32.xlu0 %v120, 67
    %v625 = vpop.permute.xlu0 %624
    %627 = vrot.lane.b32.xlu0 %v120, 3
    %v628 = vpop.permute.xlu0 %627
    %vm630 = vcmask 23552
    %v631 = vsel %vm630, %v625, %v628
    %v632 = vmul.f32 %v180, %v631
    %v633 = vadd.f32 %v632, 0.0
    %634 = vrot.lane.b32.xlu0 %v120, 68
    %v635 = vpop.permute.xlu0 %634
    %637 = vrot.lane.b32.xlu0 %v120, 4
    %v638 = vpop.permute.xlu0 %637
    %vm640 = vcmask 31744
    %v641 = vsel %vm640, %v635, %v638
    %v642 = vmul.f32 %v187, %v641
    %v643 = vadd.f32 %v642, 0.0
    %644 = vrot.lane.b32.xlu0 %v120, 69
    %v645 = vpop.permute.xlu0 %644
    %647 = vrot.lane.b32.xlu0 %v120, 5
    %v648 = vpop.permute.xlu0 %647
    %vm650 = vcmask 39936
    %v651 = vsel %vm650, %v645, %v648
    %v652 = vmul.f32 %v194, %v651
    %v653 = vadd.f32 %v652, 0.0
    %654 = vrot.lane.b32.xlu0 %v120, 70
    %v655 = vpop.permute.xlu0 %654
    %657 = vrot.lane.b32.xlu0 %v120, 6
    %v658 = vpop.permute.xlu0 %657
    %vm660 = vcmask 48128
    %v661 = vsel %vm660, %v655, %v658
    %v662 = vmul.f32 %v201, %v661
    %v663 = vadd.f32 %v662, 0.0
    %664 = vrot.lane.b32.xlu0 %v120, 71
    %v665 = vpop.permute.xlu0 %664
    %667 = vrot.lane.b32.xlu0 %v120, 7
    %v668 = vpop.permute.xlu0 %667
    %vm670 = vcmask 56320
    %v671 = vsel %vm670, %v665, %v668
    %v672 = vmul.f32 %v208, %v671
    %v673 = vadd.f32 %v672, 0.0
    %674 = vrot.lane.b32.xlu0 %v120, 72
    %v675 = vpop.permute.xlu0 %674
    %677 = vrot.lane.b32.xlu0 %v120, 8
    %v678 = vpop.permute.xlu0 %677
    %vm680 = vcmask 64512
    %v681 = vsel %vm680, %v675, %v678
    %v682 = vmul.f32 %v215, %v681
    %v683 = vadd.f32 %v602, %v682
    %684 = vrot.lane.b32.xlu0 %v120, 73
    %v685 = vpop.permute.xlu0 %684
    %687 = vrot.lane.b32.xlu0 %v120, 9
    %v688 = vpop.permute.xlu0 %687
    %vm690 = vcmask 72704
    %v691 = vsel %vm690, %v685, %v688
    %v692 = vmul.f32 %v222, %v691
    %v693 = vadd.f32 %v613, %v692
    %694 = vrot.lane.b32.xlu0 %v120, 74
    %v695 = vpop.permute.xlu0 %694
    %697 = vrot.lane.b32.xlu0 %v120, 10
    %v698 = vpop.permute.xlu0 %697
    %vm700 = vcmask 80896
    %v701 = vsel %vm700, %v695, %v698
    %v702 = vmul.f32 %v229, %v701
    %v703 = vadd.f32 %v623, %v702
    %704 = vrot.lane.b32.xlu0 %v120, 75
    %v705 = vpop.permute.xlu0 %704
    %707 = vrot.lane.b32.xlu0 %v120, 11
    %v708 = vpop.permute.xlu0 %707
    %vm710 = vcmask 89088
    %v711 = vsel %vm710, %v705, %v708
    %v712 = vmul.f32 %v236, %v711
    %v713 = vadd.f32 %v633, %v712
    %714 = vrot.lane.b32.xlu0 %v120, 76
    %v715 = vpop.permute.xlu0 %714
    %717 = vrot.lane.b32.xlu0 %v120, 12
    %v718 = vpop.permute.xlu0 %717
    %vm720 = vcmask 97280
    %v721 = vsel %vm720, %v715, %v718
    %v722 = vmul.f32 %v243, %v721
    %v723 = vadd.f32 %v643, %v722
    %724 = vrot.lane.b32.xlu0 %v120, 77
    %v725 = vpop.permute.xlu0 %724
    %727 = vrot.lane.b32.xlu0 %v120, 13
    %v728 = vpop.permute.xlu0 %727
    %vm730 = vcmask 105472
    %v731 = vsel %vm730, %v725, %v728
    %v732 = vmul.f32 %v250, %v731
    %v733 = vadd.f32 %v653, %v732
    %734 = vrot.lane.b32.xlu0 %v120, 78
    %v735 = vpop.permute.xlu0 %734
    %737 = vrot.lane.b32.xlu0 %v120, 14
    %v738 = vpop.permute.xlu0 %737
    %vm740 = vcmask 113664
    %v741 = vsel %vm740, %v735, %v738
    %v742 = vmul.f32 %v257, %v741
    %v743 = vadd.f32 %v663, %v742
    %744 = vrot.lane.b32.xlu0 %v120, 79
    %v745 = vpop.permute.xlu0 %744
    %747 = vrot.lane.b32.xlu0 %v120, 15
    %v748 = vpop.permute.xlu0 %747
    %vm750 = vcmask 121856
    %v751 = vsel %vm750, %v745, %v748
    %v752 = vmul.f32 %v264, %v751
    %v753 = vadd.f32 %v673, %v752
    %754 = vrot.lane.b32.xlu0 %v120, 80
    %v755 = vpop.permute.xlu0 %754
    %757 = vrot.lane.b32.xlu0 %v120, 16
    %v758 = vpop.permute.xlu0 %757
    %vm760 = vcmask 130048
    %v761 = vsel %vm760, %v755, %v758
    %v762 = vmul.f32 %v271, %v761
    %v763 = vadd.f32 %v683, %v762
    %764 = vrot.lane.b32.xlu0 %v120, 81
    %v765 = vpop.permute.xlu0 %764
    %767 = vrot.lane.b32.xlu0 %v120, 17
    %v768 = vpop.permute.xlu0 %767
    %vm770 = vcmask 138240
    %v771 = vsel %vm770, %v765, %v768
    %v772 = vmul.f32 %v278, %v771
    %v773 = vadd.f32 %v693, %v772
    %774 = vrot.lane.b32.xlu0 %v120, 82
    %v775 = vpop.permute.xlu0 %774
    %777 = vrot.lane.b32.xlu0 %v120, 18
    %v778 = vpop.permute.xlu0 %777
    %vm780 = vcmask 146432
    %v781 = vsel %vm780, %v775, %v778
    %v782 = vmul.f32 %v285, %v781
    %v783 = vadd.f32 %v703, %v782
    %784 = vrot.lane.b32.xlu0 %v120, 83
    %v785 = vpop.permute.xlu0 %784
    %787 = vrot.lane.b32.xlu0 %v120, 19
    %v788 = vpop.permute.xlu0 %787
    %vm790 = vcmask 154624
    %v791 = vsel %vm790, %v785, %v788
    %v792 = vmul.f32 %v292, %v791
    %v793 = vadd.f32 %v713, %v792
    %794 = vrot.lane.b32.xlu0 %v120, 84
    %v795 = vpop.permute.xlu0 %794
    %797 = vrot.lane.b32.xlu0 %v120, 20
    %v798 = vpop.permute.xlu0 %797
    %vm800 = vcmask 162816
    %v801 = vsel %vm800, %v795, %v798
    %v802 = vmul.f32 %v299, %v801
    %v803 = vadd.f32 %v723, %v802
    %804 = vrot.lane.b32.xlu0 %v120, 85
    %v805 = vpop.permute.xlu0 %804
    %807 = vrot.lane.b32.xlu0 %v120, 21
    %v808 = vpop.permute.xlu0 %807
    %vm810 = vcmask 171008
    %v811 = vsel %vm810, %v805, %v808
    %v812 = vmul.f32 %v306, %v811
    %v813 = vadd.f32 %v733, %v812
    %814 = vrot.lane.b32.xlu0 %v120, 86
    %v815 = vpop.permute.xlu0 %814
    %817 = vrot.lane.b32.xlu0 %v120, 22
    %v818 = vpop.permute.xlu0 %817
    %vm820 = vcmask 179200
    %v821 = vsel %vm820, %v815, %v818
    %v822 = vmul.f32 %v313, %v821
    %v823 = vadd.f32 %v743, %v822
    %824 = vrot.lane.b32.xlu0 %v120, 87
    %v825 = vpop.permute.xlu0 %824
    %827 = vrot.lane.b32.xlu0 %v120, 23
    %v828 = vpop.permute.xlu0 %827
    %vm830 = vcmask 187392
    %v831 = vsel %vm830, %v825, %v828
    %v832 = vmul.f32 %v320, %v831
    %v833 = vadd.f32 %v753, %v832
    %834 = vrot.lane.b32.xlu0 %v120, 88
    %v835 = vpop.permute.xlu0 %834
    %837 = vrot.lane.b32.xlu0 %v120, 24
    %v838 = vpop.permute.xlu0 %837
    %vm840 = vcmask 195584
    %v841 = vsel %vm840, %v835, %v838
    %v842 = vmul.f32 %v327, %v841
    %v843 = vadd.f32 %v763, %v842
    %844 = vrot.lane.b32.xlu0 %v120, 89
    %v845 = vpop.permute.xlu0 %844
    %847 = vrot.lane.b32.xlu0 %v120, 25
    %v848 = vpop.permute.xlu0 %847
    %vm850 = vcmask 203776
    %v851 = vsel %vm850, %v845, %v848
    %v852 = vmul.f32 %v334, %v851
    %v853 = vadd.f32 %v773, %v852
    %854 = vrot.lane.b32.xlu0 %v120, 90
    %v855 = vpop.permute.xlu0 %854
    %857 = vrot.lane.b32.xlu0 %v120, 26
    %v858 = vpop.permute.xlu0 %857
    %vm860 = vcmask 211968
    %v861 = vsel %vm860, %v855, %v858
    %v862 = vmul.f32 %v341, %v861
    %v863 = vadd.f32 %v783, %v862
    %864 = vrot.lane.b32.xlu0 %v120, 91
    %v865 = vpop.permute.xlu0 %864
    %867 = vrot.lane.b32.xlu0 %v120, 27
    %v868 = vpop.permute.xlu0 %867
    %vm870 = vcmask 220160
    %v871 = vsel %vm870, %v865, %v868
    %v872 = vmul.f32 %v348, %v871
    %v873 = vadd.f32 %v793, %v872
    %874 = vrot.lane.b32.xlu0 %v120, 92
    %v875 = vpop.permute.xlu0 %874
    %877 = vrot.lane.b32.xlu0 %v120, 28
    %v878 = vpop.permute.xlu0 %877
    %vm880 = vcmask 228352
    %v881 = vsel %vm880, %v875, %v878
    %v882 = vmul.f32 %v355, %v881
    %v883 = vadd.f32 %v803, %v882
    %884 = vrot.lane.b32.xlu0 %v120, 93
    %v885 = vpop.permute.xlu0 %884
    %887 = vrot.lane.b32.xlu0 %v120, 29
    %v888 = vpop.permute.xlu0 %887
    %vm890 = vcmask 236544
    %v891 = vsel %vm890, %v885, %v888
    %v892 = vmul.f32 %v362, %v891
    %v893 = vadd.f32 %v813, %v892
    %894 = vrot.lane.b32.xlu0 %v120, 94
    %v895 = vpop.permute.xlu0 %894
    %897 = vrot.lane.b32.xlu0 %v120, 30
    %v898 = vpop.permute.xlu0 %897
    %vm900 = vcmask 244736
    %v901 = vsel %vm900, %v895, %v898
    %v902 = vmul.f32 %v369, %v901
    %v903 = vadd.f32 %v823, %v902
    %904 = vrot.lane.b32.xlu0 %v120, 95
    %v905 = vpop.permute.xlu0 %904
    %907 = vrot.lane.b32.xlu0 %v120, 31
    %v908 = vpop.permute.xlu0 %907
    %vm910 = vcmask 252928
    %v911 = vsel %vm910, %v905, %v908
    %v912 = vmul.f32 %v376, %v911
    %v913 = vadd.f32 %v833, %v912
    %914 = vrot.lane.b32.xlu0 %v120, 96
    %v915 = vpop.permute.xlu0 %914
    %917 = vrot.lane.b32.xlu0 %v120, 32
    %v918 = vpop.permute.xlu0 %917
    %v920 = vsel %vm37, %v915, %v918
    %v921 = vmul.f32 %v383, %v920
    %v922 = vadd.f32 %v843, %v921
    %923 = vrot.lane.b32.xlu0 %v120, 97
    %v924 = vpop.permute.xlu0 %923
    %926 = vrot.lane.b32.xlu0 %v120, 33
    %v927 = vpop.permute.xlu0 %926
    %vm929 = vcmask 269312
    %v930 = vsel %vm929, %v924, %v927
    %v931 = vmul.f32 %v390, %v930
    %v932 = vadd.f32 %v853, %v931
    %933 = vrot.lane.b32.xlu0 %v120, 98
    %v934 = vpop.permute.xlu0 %933
    %936 = vrot.lane.b32.xlu0 %v120, 34
    %v937 = vpop.permute.xlu0 %936
    %vm939 = vcmask 277504
    %v940 = vsel %vm939, %v934, %v937
    %v941 = vmul.f32 %v397, %v940
    %v942 = vadd.f32 %v863, %v941
    %943 = vrot.lane.b32.xlu0 %v120, 99
    %v944 = vpop.permute.xlu0 %943
    %946 = vrot.lane.b32.xlu0 %v120, 35
    %v947 = vpop.permute.xlu0 %946
    %vm949 = vcmask 285696
    %v950 = vsel %vm949, %v944, %v947
    %v951 = vmul.f32 %v404, %v950
    %v952 = vadd.f32 %v873, %v951
    %953 = vrot.lane.b32.xlu0 %v120, 100
    %v954 = vpop.permute.xlu0 %953
    %956 = vrot.lane.b32.xlu0 %v120, 36
    %v957 = vpop.permute.xlu0 %956
    %vm959 = vcmask 293888
    %v960 = vsel %vm959, %v954, %v957
    %v961 = vmul.f32 %v411, %v960
    %v962 = vadd.f32 %v883, %v961
    %963 = vrot.lane.b32.xlu0 %v120, 101
    %v964 = vpop.permute.xlu0 %963
    %966 = vrot.lane.b32.xlu0 %v120, 37
    %v967 = vpop.permute.xlu0 %966
    %vm969 = vcmask 302080
    %v970 = vsel %vm969, %v964, %v967
    %v971 = vmul.f32 %v418, %v970
    %v972 = vadd.f32 %v893, %v971
    %973 = vrot.lane.b32.xlu0 %v120, 102
    %v974 = vpop.permute.xlu0 %973
    %976 = vrot.lane.b32.xlu0 %v120, 38
    %v977 = vpop.permute.xlu0 %976
    %vm979 = vcmask 310272
    %v980 = vsel %vm979, %v974, %v977
    %v981 = vmul.f32 %v425, %v980
    %v982 = vadd.f32 %v903, %v981
    %983 = vrot.lane.b32.xlu0 %v120, 103
    %v984 = vpop.permute.xlu0 %983
    %986 = vrot.lane.b32.xlu0 %v120, 39
    %v987 = vpop.permute.xlu0 %986
    %vm989 = vcmask 318464
    %v990 = vsel %vm989, %v984, %v987
    %v991 = vmul.f32 %v432, %v990
    %v992 = vadd.f32 %v913, %v991
    %993 = vrot.lane.b32.xlu0 %v120, 104
    %v994 = vpop.permute.xlu0 %993
    %996 = vrot.lane.b32.xlu0 %v120, 40
    %v997 = vpop.permute.xlu0 %996
    %vm999 = vcmask 326656
    %v1000 = vsel %vm999, %v994, %v997
    %v1001 = vmul.f32 %v439, %v1000
    %v1002 = vadd.f32 %v922, %v1001
    %1003 = vrot.lane.b32.xlu0 %v120, 105
    %v1004 = vpop.permute.xlu0 %1003
    %1006 = vrot.lane.b32.xlu0 %v120, 41
    %v1007 = vpop.permute.xlu0 %1006
    %vm1009 = vcmask 334848
    %v1010 = vsel %vm1009, %v1004, %v1007
    %v1011 = vmul.f32 %v446, %v1010
    %v1012 = vadd.f32 %v932, %v1011
    %1013 = vrot.lane.b32.xlu0 %v120, 106
    %v1014 = vpop.permute.xlu0 %1013
    %1016 = vrot.lane.b32.xlu0 %v120, 42
    %v1017 = vpop.permute.xlu0 %1016
    %vm1019 = vcmask 343040
    %v1020 = vsel %vm1019, %v1014, %v1017
    %v1021 = vmul.f32 %v453, %v1020
    %v1022 = vadd.f32 %v942, %v1021
    %1023 = vrot.lane.b32.xlu0 %v120, 107
    %v1024 = vpop.permute.xlu0 %1023
    %1026 = vrot.lane.b32.xlu0 %v120, 43
    %v1027 = vpop.permute.xlu0 %1026
    %vm1029 = vcmask 351232
    %v1030 = vsel %vm1029, %v1024, %v1027
    %v1031 = vmul.f32 %v460, %v1030
    %v1032 = vadd.f32 %v952, %v1031
    %1033 = vrot.lane.b32.xlu0 %v120, 108
    %v1034 = vpop.permute.xlu0 %1033
    %1036 = vrot.lane.b32.xlu0 %v120, 44
    %v1037 = vpop.permute.xlu0 %1036
    %vm1039 = vcmask 359424
    %v1040 = vsel %vm1039, %v1034, %v1037
    %v1041 = vmul.f32 %v467, %v1040
    %v1042 = vadd.f32 %v962, %v1041
    %1043 = vrot.lane.b32.xlu0 %v120, 109
    %v1044 = vpop.permute.xlu0 %1043
    %1046 = vrot.lane.b32.xlu0 %v120, 45
    %v1047 = vpop.permute.xlu0 %1046
    %vm1049 = vcmask 367616
    %v1050 = vsel %vm1049, %v1044, %v1047
    %v1051 = vmul.f32 %v474, %v1050
    %v1052 = vadd.f32 %v972, %v1051
    %1053 = vrot.lane.b32.xlu0 %v120, 110
    %v1054 = vpop.permute.xlu0 %1053
    %1056 = vrot.lane.b32.xlu0 %v120, 46
    %v1057 = vpop.permute.xlu0 %1056
    %vm1059 = vcmask 375808
    %v1060 = vsel %vm1059, %v1054, %v1057
    %v1061 = vmul.f32 %v481, %v1060
    %v1062 = vadd.f32 %v982, %v1061
    %1063 = vrot.lane.b32.xlu0 %v120, 111
    %v1064 = vpop.permute.xlu0 %1063
    %1066 = vrot.lane.b32.xlu0 %v120, 47
    %v1067 = vpop.permute.xlu0 %1066
    %vm1069 = vcmask 384000
    %v1070 = vsel %vm1069, %v1064, %v1067
    %v1071 = vmul.f32 %v488, %v1070
    %v1072 = vadd.f32 %v992, %v1071
    %1073 = vrot.lane.b32.xlu0 %v120, 112
    %v1074 = vpop.permute.xlu0 %1073
    %1076 = vrot.lane.b32.xlu0 %v120, 48
    %v1077 = vpop.permute.xlu0 %1076
    %vm1079 = vcmask 392192
    %v1080 = vsel %vm1079, %v1074, %v1077
    %v1081 = vmul.f32 %v495, %v1080
    %v1082 = vadd.f32 %v1002, %v1081
    %1083 = vrot.lane.b32.xlu0 %v120, 113
    %v1084 = vpop.permute.xlu0 %1083
    %1086 = vrot.lane.b32.xlu0 %v120, 49
    %v1087 = vpop.permute.xlu0 %1086
    %vm1089 = vcmask 400384
    %v1090 = vsel %vm1089, %v1084, %v1087
    %v1091 = vmul.f32 %v502, %v1090
    %v1092 = vadd.f32 %v1012, %v1091
    %1093 = vrot.lane.b32.xlu0 %v120, 114
    %v1094 = vpop.permute.xlu0 %1093
    %1096 = vrot.lane.b32.xlu0 %v120, 50
    %v1097 = vpop.permute.xlu0 %1096
    %vm1099 = vcmask 408576
    %v1100 = vsel %vm1099, %v1094, %v1097
    %v1101 = vmul.f32 %v509, %v1100
    %v1102 = vadd.f32 %v1022, %v1101
    %1103 = vrot.lane.b32.xlu0 %v120, 115
    %v1104 = vpop.permute.xlu0 %1103
    %1106 = vrot.lane.b32.xlu0 %v120, 51
    %v1107 = vpop.permute.xlu0 %1106
    %vm1109 = vcmask 416768
    %v1110 = vsel %vm1109, %v1104, %v1107
    %v1111 = vmul.f32 %v516, %v1110
    %v1112 = vadd.f32 %v1032, %v1111
    %1113 = vrot.lane.b32.xlu0 %v120, 116
    %v1114 = vpop.permute.xlu0 %1113
    %1116 = vrot.lane.b32.xlu0 %v120, 52
    %v1117 = vpop.permute.xlu0 %1116
    %vm1119 = vcmask 424960
    %v1120 = vsel %vm1119, %v1114, %v1117
    %v1121 = vmul.f32 %v523, %v1120
    %v1122 = vadd.f32 %v1042, %v1121
    %1123 = vrot.lane.b32.xlu0 %v120, 117
    %v1124 = vpop.permute.xlu0 %1123
    %1126 = vrot.lane.b32.xlu0 %v120, 53
    %v1127 = vpop.permute.xlu0 %1126
    %vm1129 = vcmask 433152
    %v1130 = vsel %vm1129, %v1124, %v1127
    %v1131 = vmul.f32 %v530, %v1130
    %v1132 = vadd.f32 %v1052, %v1131
    %1133 = vrot.lane.b32.xlu0 %v120, 118
    %v1134 = vpop.permute.xlu0 %1133
    %1136 = vrot.lane.b32.xlu0 %v120, 54
    %v1137 = vpop.permute.xlu0 %1136
    %vm1139 = vcmask 441344
    %v1140 = vsel %vm1139, %v1134, %v1137
    %v1141 = vmul.f32 %v537, %v1140
    %v1142 = vadd.f32 %v1062, %v1141
    %1143 = vrot.lane.b32.xlu0 %v120, 119
    %v1144 = vpop.permute.xlu0 %1143
    %1146 = vrot.lane.b32.xlu0 %v120, 55
    %v1147 = vpop.permute.xlu0 %1146
    %vm1149 = vcmask 449536
    %v1150 = vsel %vm1149, %v1144, %v1147
    %v1151 = vmul.f32 %v544, %v1150
    %v1152 = vadd.f32 %v1072, %v1151
    %1153 = vrot.lane.b32.xlu0 %v120, 120
    %v1154 = vpop.permute.xlu0 %1153
    %1156 = vrot.lane.b32.xlu0 %v120, 56
    %v1157 = vpop.permute.xlu0 %1156
    %vm1159 = vcmask 457728
    %v1160 = vsel %vm1159, %v1154, %v1157
    %v1161 = vmul.f32 %v551, %v1160
    %v1162 = vadd.f32 %v1082, %v1161
    %1163 = vrot.lane.b32.xlu0 %v120, 121
    %v1164 = vpop.permute.xlu0 %1163
    %1166 = vrot.lane.b32.xlu0 %v120, 57
    %v1167 = vpop.permute.xlu0 %1166
    %vm1169 = vcmask 465920
    %v1170 = vsel %vm1169, %v1164, %v1167
    %v1171 = vmul.f32 %v558, %v1170
    %v1172 = vadd.f32 %v1092, %v1171
    %1173 = vrot.lane.b32.xlu0 %v120, 122
    %v1174 = vpop.permute.xlu0 %1173
    %1176 = vrot.lane.b32.xlu0 %v120, 58
    %v1177 = vpop.permute.xlu0 %1176
    %vm1179 = vcmask 474112
    %v1180 = vsel %vm1179, %v1174, %v1177
    %v1181 = vmul.f32 %v565, %v1180
    %v1182 = vadd.f32 %v1102, %v1181
    %1183 = vrot.lane.b32.xlu0 %v120, 123
    %v1184 = vpop.permute.xlu0 %1183
    %1186 = vrot.lane.b32.xlu0 %v120, 59
    %v1187 = vpop.permute.xlu0 %1186
    %vm1189 = vcmask 482304
    %v1190 = vsel %vm1189, %v1184, %v1187
    %v1191 = vmul.f32 %v572, %v1190
    %v1192 = vadd.f32 %v1112, %v1191
    %1193 = vrot.lane.b32.xlu0 %v120, 124
    %v1194 = vpop.permute.xlu0 %1193
    %1196 = vrot.lane.b32.xlu0 %v120, 60
    %v1197 = vpop.permute.xlu0 %1196
    %vm1199 = vcmask 490496
    %v1200 = vsel %vm1199, %v1194, %v1197
    %v1201 = vmul.f32 %v579, %v1200
    %v1202 = vadd.f32 %v1122, %v1201
    %1203 = vrot.lane.b32.xlu0 %v120, 125
    %v1204 = vpop.permute.xlu0 %1203
    %1206 = vrot.lane.b32.xlu0 %v120, 61
    %v1207 = vpop.permute.xlu0 %1206
    %vm1209 = vcmask 498688
    %v1210 = vsel %vm1209, %v1204, %v1207
    %v1211 = vmul.f32 %v586, %v1210
    %v1212 = vadd.f32 %v1132, %v1211
    %1213 = vrot.lane.b32.xlu0 %v120, 126
    %v1214 = vpop.permute.xlu0 %1213
    %1216 = vrot.lane.b32.xlu0 %v120, 62
    %v1217 = vpop.permute.xlu0 %1216
    %vm1219 = vcmask 506880
    %v1220 = vsel %vm1219, %v1214, %v1217
    %v1221 = vmul.f32 %v593, %v1220
    %v1222 = vadd.f32 %v1142, %v1221
    %1223 = vrot.lane.b32.xlu0 %v120, 127
    %v1224 = vpop.permute.xlu0 %1223
    %1226 = vrot.lane.b32.xlu0 %v120, 63
    %v1227 = vpop.permute.xlu0 %1226
    %vm1229 = vcmask 515072
    %v1230 = vsel %vm1229, %v1224, %v1227
    %v1231 = vmul.f32 %v600, %v1230
    %v1232 = vadd.f32 %v1152, %v1231
    %v1233 = vadd.f32 %v1162, %v1172
    %v1234 = vadd.f32 %v1182, %v1192
    %v1235 = vadd.f32 %v1202, %v1212
    %v1236 = vadd.f32 %v1222, %v1232
    %v1237 = vadd.f32 %v1233, %v1234
    %v1238 = vadd.f32 %v1235, %v1236
    %v1239 = vadd.f32 %v1237, %v1238
    %v1240 = vld [vmem:[%s4] sm:$0xff]
    %v1241 = vld [vmem:[%s4 + $0x8] sm:$0xff]
    %v1242 = vld [vmem:[%s4 + $0x10] sm:$0xff]
    %v1243 = vld [vmem:[%s4 + $0x18] sm:$0xff]
    %v1244 = vld [vmem:[%s4 + $0x20] sm:$0xff]
    %v1245 = vld [vmem:[%s4 + $0x28] sm:$0xff]
    %v1246 = vld [vmem:[%s4 + $0x30] sm:$0xff]
    %v1247 = vld [vmem:[%s4 + $0x38] sm:$0xff]
    %v1248 = vld [vmem:[%s5] sm:$0x1]
    %v1250 = vlaneseq
    %v1251 = vshrl.u32 %v1250, 7
    %v1252 = vsub.s32 0, %v1251
    %v1253 = vrot.slane %v1248, %v1252
    %vm1255 = vcmask 523264
    %v1257 = vsel %vm1255, %v1239, 0
    %1259 = vmatprep.subr.mxu0 0.0
    %1260 = vmatpush1.msra.mxu0 0.0
    %1261 = vmatprep.subr.mxu0 0.0
    %1262 = vmatpush1.msra.mxu0 0.0
    %1263 = vmatprep.subr.mxu0 0.0
    %1264 = vmatpush1.msra.mxu0 0.0
    %1265 = vmatprep.subr.mxu0 0.0
    %1266 = vmatpush1.msra.mxu0 0.0
    %1267 = vmatprep.subr.mxu0 0.0
    %1268 = vmatpush1.msra.mxu0 0.0
    %1269 = vmatprep.subr.mxu0 0.0
    %1270 = vmatpush1.msra.mxu0 0.0
    %1271 = vmatprep.subr.mxu0 0.0
    %1272 = vmatpush1.msra.mxu0 0.0
    %1273 = vmatprep.subr.mxu0 0.0
    %1274 = vmatpush1.msra.mxu0 0.0
    %1275 = vmatprep.subr.mxu0 0.0
    %1276 = vmatpush1.msra.mxu0 %v1247
    %1277 = vmatprep.subr.mxu0 0.0
    %1278 = vmatpush1.msra.mxu0 %v1246
    %1279 = vmatprep.subr.mxu0 0.0
    %1280 = vmatpush1.msra.mxu0 %v1245
    %1281 = vmatprep.subr.mxu0 0.0
    %1282 = vmatpush1.msra.mxu0 %v1244
    %1283 = vmatprep.subr.mxu0 0.0
    %1284 = vmatpush1.msra.mxu0 %v1243
    %1285 = vmatprep.subr.mxu0 0.0
    %1286 = vmatpush1.msra.mxu0 %v1242
    %1287 = vmatprep.subr.mxu0 0.0
    %1288 = vmatpush1.msra.mxu0 %v1241
    %1289 = vmatprep.subr.mxu0 0.0
    %1290 = vmatpush1.msra.mxu0 %v1240
    %1291 = vmatprep.subr.mxu0 0.0
    %1292 = vmatpush2.msra.mxu0 0.0
    %1293 = vmatprep.subr.mxu0 0.0
    %1294 = vmatpush2.msra.mxu0 0.0
    %1295 = vmatprep.subr.mxu0 0.0
    %1296 = vmatpush2.msra.mxu0 0.0
    %1297 = vmatprep.subr.mxu0 0.0
    %1298 = vmatpush2.msra.mxu0 0.0
    %1299 = vmatprep.subr.mxu0 0.0
    %1300 = vmatpush2.msra.mxu0 0.0
    %1301 = vmatprep.subr.mxu0 0.0
    %1302 = vmatpush2.msra.mxu0 0.0
    %1303 = vmatprep.subr.mxu0 0.0
    %1304 = vmatpush2.msra.mxu0 0.0
    %1305 = vmatprep.subr.mxu0 0.0
    %1306 = vmatpush2.msra.mxu0 0.0
    %1307 = vmatprep.subr.mxu0 0.0
    %1308 = vmatpush2.msra.mxu0 0.0
    %1309 = vmatprep.subr.mxu0 0.0
    %1310 = vmatpush2.msra.mxu0 0.0
    %1311 = vmatprep.subr.mxu0 0.0
    %1312 = vmatpush2.msra.mxu0 0.0
    %1313 = vmatprep.subr.mxu0 0.0
    %1314 = vmatpush2.msra.mxu0 0.0
    %1315 = vmatprep.subr.mxu0 0.0
    %1316 = vmatpush2.msra.mxu0 0.0
    %1317 = vmatprep.subr.mxu0 0.0
    %1318 = vmatpush2.msra.mxu0 0.0
    %1319 = vmatprep.subr.mxu0 0.0
    %1320 = vmatpush2.msra.mxu0 0.0
    %1321 = vmatprep.subr.mxu0 0.0
    %1322 = vmatpush2.msra.mxu0 0.0
    %1323 = vmatprep.mubr.f32.mxu0 0.0
    %1324 = vmatmul.mubr.f32.gmra.mxu0 %v1257
    %v1325 = vpop.f32.mrf.mxu0
    %v1326 = vadd.f32 %v1253, %v1325
    %v1327 = vpop.f32.mrf.mxu0
    %1328 = vdwg.mxu0
    %1329 = vst.msk [vmem:[#allocation2] sm:$0xff] %vm680, %v1326
    // Predicated region
    $region26: #{tpu_custom_call.1} parent=1 // pred_check
      _
    $region27: #{tpu_custom_call.1} parent=1 // pred_check_branch
      %1331 = sbr.rel (0) target = $region29
    $region28: #{tpu_custom_call.1} parent=1 // pred_region
      %s1333 = ssub.s32 128, 128
      %1334 = vsyncadd [#allocation3], %s1333
      %s1336 = sshll.u32 [#allocation2], 4
      %s1337 = int_to_ptr.vmem [resolvable:$true] %s1336
      %1339 = dma.vmem_to_hbm [thread:$0]  %s1337, 128, %s6, [#allocation3]
    $region29: #{tpu_custom_call.1} parent=1 // pred_fallthru
      _
    // Predicated region
    $region30: #{tpu_custom_call.1} parent=1 // pred_check
      _
    $region31: #{tpu_custom_call.1} parent=1 // pred_check_branch
      %1341 = sbr.rel (0) target = $region33
    $region32: #{tpu_custom_call.1} parent=1 // pred_region
      %1342 = dma.done [#allocation3], 128
    $region33: #{tpu_custom_call.1} parent=1 // pred_fallthru
      _
    %1343 = vsyncpa [#allocation3], 1

</llo_original>
